<compile_context>
chip_gen: v7x
topology: tpu7x:2x2x1
jax: 0.10.0
libtpu: 0.0.40
codegen_flags: <defaults>
</compile_context>

<pallas_src>
import collections
import functools

import numpy as np
import jax
import jax.numpy as jnp
from jax.experimental import pallas as pl
from jax.experimental.pallas import tpu as pltpu

Meta = collections.namedtuple(
    "Meta", ["hw", "num_channels", "action_size", "f1p", "f2p", "fcp", "tile_m"])


# ---------------- fused Pallas kernel (one batch tile per grid step) ----------------

def _actor_kernel(x_ref, bn_ref, bias_ref, d1_ref, d2_ref, fcw_ref,
                  o_ref, xn_ref, *, hw, num_channels, action_size,
                  f1p, f2p, fcp):
    f32 = jnp.float32

    # ---- BatchNorm2d: per-state training-mode stats per channel (biased var, eps=1e-5)
    # x_ref is (TILE_M, C*H*W); channel c lives in lanes [c*hw, (c+1)*hw).
    for c in range(num_channels):                      # static unroll (C=3)
        lo, hi = c * hw, (c + 1) * hw
        xs = x_ref[:, lo:hi]                           # (TILE_M, hw) f32
        mean = jnp.mean(xs, axis=1, keepdims=True)
        var = jnp.mean((xs - mean) ** 2, axis=1, keepdims=True)
        gamma = bn_ref[0:1, lo:hi]                     # lane-broadcast gamma_c
        beta = bn_ref[1:2, lo:hi]                      # lane-broadcast beta_c
        xn = gamma * (xs - mean) * jax.lax.rsqrt(var + 1e-5) + beta
        xn_ref[:, lo:hi] = xn.astype(xn_ref.dtype)     # cast to bf16 at MXU operand

    # ---- bias slab slices (all offsets are multiples of 128 -> lane aligned)
    o0 = f1p
    o1 = f1p + f2p
    o2 = o1 + fcp
    o3 = o2 + fcp
    cb1 = bias_ref[:, 0:o0]
    cb2 = bias_ref[:, o0:o1]
    fb1 = bias_ref[:, o1:o2]
    fb2 = bias_ref[:, o2:o3]
    fb3 = bias_ref[:, o3:o3 + fcp]

    # ---- fc weight slab row slices (w1 | w2 | w3 stacked on rows)
    w1 = fcw_ref[0:f2p, :]
    w2 = fcw_ref[f2p:f2p + fcp, :]
    w3 = fcw_ref[f2p + fcp:f2p + 2 * fcp, :]

    # ---- conv1 as ONE dense contraction + bias + ReLU (dropout == identity)
    y = jnp.dot(xn_ref[...], d1_ref[...], preferred_element_type=f32) + cb1
    y = jnp.maximum(y, 0.0)

    # ---- conv2 as dense matmul + bias + ReLU
    y = jnp.dot(y.astype(jnp.bfloat16), d2_ref[...],
                preferred_element_type=f32) + cb2
    y = jnp.maximum(y, 0.0)

    # ---- fc1 / fc2 / fc3 + ReLU
    y = jnp.maximum(jnp.dot(y.astype(jnp.bfloat16), w1,
                            preferred_element_type=f32) + fb1, 0.0)
    y = jnp.maximum(jnp.dot(y.astype(jnp.bfloat16), w2,
                            preferred_element_type=f32) + fb2, 0.0)
    y = jnp.maximum(jnp.dot(y.astype(jnp.bfloat16), w3,
                            preferred_element_type=f32) + fb3, 0.0)

    # ---- softmax over the real action lanes (padded lanes masked out) ----
    lane = jax.lax.broadcasted_iota(jnp.int32, y.shape, 1)
    y = jnp.where(lane < action_size, y, jnp.float32(-1e30))
    m = jnp.max(y, axis=-1, keepdims=True)
    e = jnp.exp(y - m)
    s = jnp.sum(e, axis=-1, keepdims=True)
    o_ref[...] = e / s                                  # exact normalization


def actor_forward(states, prep, *, meta):
    """states: (M, C, H, W) f32 batch of independent states. prep: prepare_params()."""
    M, C, H, W = states.shape
    chw = C * H * W
    tm = meta.tile_m
    m_pad = -(-M // tm) * tm                            # round batch up to tile
    x = states.reshape(M, chw)
    if m_pad != M:
        x = jnp.pad(x, ((0, m_pad - M), (0, 0)))

    kernel = functools.partial(
        _actor_kernel, hw=meta.hw, num_channels=meta.num_channels,
        action_size=meta.action_size, f1p=meta.f1p, f2p=meta.f2p, fcp=meta.fcp)

    out = pl.pallas_call(
        kernel,
        grid=(m_pad // tm,),
        out_shape=jax.ShapeDtypeStruct((m_pad, meta.fcp), jnp.float32),
        in_specs=[
            pl.BlockSpec((tm, chw), lambda m: (m, 0)),            # x (tiled over batch)
            pl.BlockSpec(prep["bn"].shape, lambda m: (0, 0)),     # BN gamma/beta slab
            pl.BlockSpec(prep["bias"].shape, lambda m: (0, 0)),   # all biases, one slab
            pl.BlockSpec(prep["d1"].shape, lambda m: (0, 0)),     # dense conv1 (bf16)
            pl.BlockSpec(prep["d2"].shape, lambda m: (0, 0)),     # dense conv2 (bf16)
            pl.BlockSpec(prep["fcw"].shape, lambda m: (0, 0)),    # fc1|fc2|fc3 (bf16)
        ],
        out_specs=pl.BlockSpec((tm, meta.fcp), lambda m: (m, 0)),
        scratch_shapes=[pltpu.VMEM((tm, chw), jnp.bfloat16)],     # normalized x
        compiler_params=pltpu.CompilerParams(
            dimension_semantics=("parallel",)),                   # v7x: split over 2 TCs
    )(x, prep["bn"], prep["bias"], prep["d1"], prep["d2"], prep["fcw"])

    return out[:M, :meta.action_size]                             # (M, action_size)


# ---------------- one-time (init-side) weight preprocessing ----------------

def _conv_as_dense(weight, in_shape, stride):
    """Exact dense matrix of a VALID, stride-`stride` conv (no bias), numpy/host-side.

    Returns D of shape (C*H*W, O*oh*ow) such that
        flatten(conv(x)) == flatten(x) @ D
    with both flattens in (channel, row, col) order (== torch .flatten()).
    """
    w = np.asarray(weight, np.float32)                  # (O, C, kh, kw) torch layout
    O, C, kh, kw = w.shape
    _, H, W = in_shape
    oh = (H - kh) // stride + 1
    ow = (W - kw) // stride + 1
    D = np.zeros((C, H, W, O, oh, ow), np.float32)
    for i in range(kh):
        for j in range(kw):
            for p in range(oh):
                for q in range(ow):
                    D[:, p * stride + i, q * stride + j, :, p, q] = w[:, :, i, j].T
    return D.reshape(C * H * W, O * oh * ow), (O, oh, ow)


def _pad2(a, rows, cols):
    out = np.zeros((rows, cols), np.float32)
    out[:a.shape[0], :a.shape[1]] = a
    return out


def prepare_params(params, in_shape, stride, stride2, action_size, tile_m=8):
    """Init-time only: dense conv matrices, lane-padded bf16 weight slabs,
    one bias slab, one BN slab.  The per-call forward is reshape + pallas_call."""
    C, H, W = in_shape
    hw = H * W
    d1, (o1, oh1, ow1) = _conv_as_dense(params["conv1_w"], (C, H, W), stride)
    d2, (o2, oh2, ow2) = _conv_as_dense(params["conv2_w"], (o1, oh1, ow1), stride2)
    f1, f2 = o1 * oh1 * ow1, o2 * oh2 * ow2
    hidden = int(params["fc1_w"].shape[0])
    hidden2 = int(params["fc2_w"].shape[0])

    def pad128(n):
        return -(-n // 128) * 128

    f1p, f2p = pad128(f1), pad128(f2)
    fcp = pad128(max(hidden, hidden2, action_size))     # uniform fc lane width

    d1p = _pad2(d1, C * hw, f1p)                        # (C*H*W, F1p)
    d2p = _pad2(d2, f1p, f2p)                           # (F1p, F2p)
    w1p = _pad2(np.asarray(params["fc1_w"], np.float32).T, f2p, fcp)
    w2p = _pad2(np.asarray(params["fc2_w"], np.float32).T, fcp, fcp)
    w3p = _pad2(np.asarray(params["fc3_w"], np.float32).T, fcp, fcp)
    fcw = np.concatenate([w1p, w2p, w3p], axis=0)       # (F2p + 2*fcp, fcp)

    cb1 = np.zeros((f1p,), np.float32)
    cb1[:f1] = np.repeat(np.asarray(params["conv1_b"], np.float32), oh1 * ow1)
    cb2 = np.zeros((f2p,), np.float32)
    cb2[:f2] = np.repeat(np.asarray(params["conv2_b"], np.float32), oh2 * ow2)
    fb1 = np.zeros((fcp,), np.float32); fb1[:hidden] = np.asarray(params["fc1_b"])
    fb2 = np.zeros((fcp,), np.float32); fb2[:hidden2] = np.asarray(params["fc2_b"])
    fb3 = np.zeros((fcp,), np.float32); fb3[:action_size] = np.asarray(params["fc3_b"])
    bias = np.concatenate([cb1, cb2, fb1, fb2, fb3]).reshape(1, -1)

    bn = np.zeros((2, C * hw), np.float32)
    bn[0] = np.repeat(np.asarray(params["bn_gamma"], np.float32), hw)
    bn[1] = np.repeat(np.asarray(params["bn_beta"], np.float32), hw)

    prep = {
        "bn": jnp.asarray(bn),
        "bias": jnp.asarray(bias),
        "d1": jnp.asarray(d1p, dtype=jnp.bfloat16),
        "d2": jnp.asarray(d2p, dtype=jnp.bfloat16),
        "fcw": jnp.asarray(fcw, dtype=jnp.bfloat16),
    }
    meta = Meta(hw=hw, num_channels=C, action_size=action_size,
                f1p=f1p, f2p=f2p, fcp=fcp, tile_m=tile_m)
    return prep, meta


# ---------------- deterministic parameter init (torch layouts) ----------------

def init_params(key, in_c, out_c, k, in_c2, out_c2, k2,
                linear_input, hidden, hidden2, action_size):
    ks = jax.random.split(key, 8)

    def kaiming_uniform(k_, shape, fan_in):
        bound = jnp.sqrt(6.0 / fan_in)
        return jax.random.uniform(k_, shape, jnp.float32, -bound, bound)

    return {
        "bn_gamma": jnp.ones((in_c,), jnp.float32),
        "bn_beta": jnp.zeros((in_c,), jnp.float32),
        "conv1_w": kaiming_uniform(ks[0], (out_c, in_c, k, k), in_c * k * k),
        "conv1_b": 0.01 * jnp.ones((out_c,), jnp.float32),
        "conv2_w": kaiming_uniform(ks[1], (out_c2, out_c, k2, k2), out_c * k2 * k2),
        "conv2_b": 0.01 * jnp.ones((out_c2,), jnp.float32),
        # he_init in the torch module: kaiming_uniform_ weights, bias = 0.01
        "fc1_w": kaiming_uniform(ks[2], (hidden, linear_input), linear_input),
        "fc1_b": 0.01 * jnp.ones((hidden,), jnp.float32),
        "fc2_w": kaiming_uniform(ks[3], (hidden2, hidden), hidden),
        "fc2_b": 0.01 * jnp.ones((hidden2,), jnp.float32),
        "fc3_w": kaiming_uniform(ks[4], (action_size, hidden2), hidden2),
        "fc3_b": 0.01 * jnp.ones((action_size,), jnp.float32),
    }


# ---------------- pure-JAX reference (correctness check only) ----------------

def actor_reference(state, params, stride, stride2):
    hp = jax.lax.Precision.HIGHEST
    x = state[None]                                       # (1, C, H, W)
    mean = x.mean(axis=(0, 2, 3), keepdims=True)
    var = ((x - mean) ** 2).mean(axis=(0, 2, 3), keepdims=True)
    x = (params["bn_gamma"].reshape(1, -1, 1, 1) * (x - mean)
         * jax.lax.rsqrt(var + 1e-5) + params["bn_beta"].reshape(1, -1, 1, 1))
    x = jax.lax.conv_general_dilated(
        x, params["conv1_w"], (stride, stride), "VALID",
        dimension_numbers=("NCHW", "OIHW", "NCHW"), precision=hp)
    x = jax.nn.relu(x + params["conv1_b"].reshape(1, -1, 1, 1))
    x = jax.lax.conv_general_dilated(
        x, params["conv2_w"], (stride2, stride2), "VALID",
        dimension_numbers=("NCHW", "OIHW", "NCHW"), precision=hp)
    x = jax.nn.relu(x + params["conv2_b"].reshape(1, -1, 1, 1))
    x = x.reshape(-1)
    x = jax.nn.relu(jnp.dot(params["fc1_w"], x, precision=hp) + params["fc1_b"])
    x = jax.nn.relu(jnp.dot(params["fc2_w"], x, precision=hp) + params["fc2_b"])
    x = jax.nn.relu(jnp.dot(params["fc3_w"], x, precision=hp) + params["fc3_b"])
    return jax.nn.softmax(x, axis=-1)


if __name__ == "__main__":
    # Module hyperparameters (BatchNorm2d(num_features=3) fixes C=3).
    H = W = 16
    input_channels, output_channels, kernel_size, stride = 3, 8, 3, 2
    input_channels2, output_channels2, kernel_size2, stride2 = 8, 16, 3, 2
    oh1 = (H - kernel_size) // stride + 1                 # 7
    oh2 = (oh1 - kernel_size2) // stride2 + 1             # 3
    linear_input = output_channels2 * oh2 * oh2           # 144
    hidden_layer, hidden2_layer, action_size = 64, 32, 8
    batch = 16                                            # independent states

    key = jax.random.PRNGKey(0)
    k_state, k_params = jax.random.split(key)
    states = jax.random.normal(k_state, (batch, input_channels, H, W), jnp.float32)
    params = init_params(k_params, input_channels, output_channels, kernel_size,
                         input_channels2, output_channels2, kernel_size2,
                         linear_input, hidden_layer, hidden2_layer, action_size)

    # One-time weight preprocessing (host-side, outside the jitted forward).
    prep, meta = prepare_params(params, (input_channels, H, W), stride, stride2,
                                action_size, tile_m=8)

    fwd = jax.jit(functools.partial(actor_forward, meta=meta))
    out = fwd(states, prep)
    jax.block_until_ready(out)

    assert out.shape == (batch, action_size)
    assert bool(jnp.isfinite(out).all())
    # softmax rows normalize exactly (exact division in-kernel)
    assert float(jnp.max(jnp.abs(out.sum(axis=-1) - 1.0))) < 1e-3

    # Cross-check the fused Pallas kernel against a pure-JAX f32 reference
    # (each row == the single-state torch forward semantics).
    ref = jax.vmap(lambda s: actor_reference(s, params, stride, stride2))(states)
    assert float(jnp.max(jnp.abs(out - ref))) < 1.5e-2

    print("KERNEL_OK")
</pallas_src>

<mosaic_0001>
module attributes {stable_mosaic.version = 11 : i64} {
  func.func @_actor_kernel(%arg0: i32, %arg1: memref<8x768xf32, #tpu.memory_space<vmem>>, %arg2: memref<2x768xf32, #tpu.memory_space<vmem>>, %arg3: memref<1x1152xf32, #tpu.memory_space<vmem>>, %arg4: memref<768x512xbf16, #tpu.memory_space<vmem>>, %arg5: memref<512x256xbf16, #tpu.memory_space<vmem>>, %arg6: memref<512x128xbf16, #tpu.memory_space<vmem>>, %arg7: memref<8x128xf32, #tpu.memory_space<vmem>>, %arg8: memref<8x768xbf16, #tpu.memory_space<vmem>>) attributes {dimension_semantics = [#tpu.dimension_semantics<parallel>], iteration_bounds = array<i64: 2>, scalar_prefetch = 0 : i64, scratch_operands = 1 : i64, tpu.core_type = #tpu.core_type<tc>, window_params = [{transform_indices = @transform_0, window_bounds = array<i64: 8, 768>}, {pipeline_mode = #tpu.pipeline_mode<synchronous>, transform_indices = @transform_1, window_bounds = array<i64: 2, 768>}, {pipeline_mode = #tpu.pipeline_mode<synchronous>, transform_indices = @transform_2, window_bounds = array<i64: 1, 1152>}, {pipeline_mode = #tpu.pipeline_mode<synchronous>, transform_indices = @transform_3, window_bounds = array<i64: 768, 512>}, {pipeline_mode = #tpu.pipeline_mode<synchronous>, transform_indices = @transform_4, window_bounds = array<i64: 512, 256>}, {pipeline_mode = #tpu.pipeline_mode<synchronous>, transform_indices = @transform_5, window_bounds = array<i64: 512, 128>}, {transform_indices = @transform_6, window_bounds = array<i64: 8, 128>}]} {
    %c0 = arith.constant 0 : index
    %c0_0 = arith.constant 0 : index
    %0 = vector.load %arg1[%c0, %c0_0] : memref<8x768xf32, #tpu.memory_space<vmem>>, vector<8x256xf32>
    %cst = arith.constant dense<0.000000e+00> : vector<8xf32>
    %1 = vector.multi_reduction <add>, %0, %cst [1] : vector<8x256xf32> to vector<8xf32>
    %2 = vector.shape_cast %1 : vector<8xf32> to vector<8x1xf32>
    %cst_1 = arith.constant 2.560000e+02 : f32
    %3 = vector.broadcast %cst_1 : f32 to vector<8x1xf32>
    %4 = arith.divf %2, %3 : vector<8x1xf32>
    %5 = vector.broadcast %4 : vector<8x1xf32> to vector<8x256xf32>
    %6 = arith.subf %0, %5 : vector<8x256xf32>
    %7 = arith.mulf %6, %6 : vector<8x256xf32>
    %cst_2 = arith.constant dense<0.000000e+00> : vector<8xf32>
    %8 = vector.multi_reduction <add>, %7, %cst_2 [1] : vector<8x256xf32> to vector<8xf32>
    %9 = vector.shape_cast %8 : vector<8xf32> to vector<8x1xf32>
    %cst_3 = arith.constant 2.560000e+02 : f32
    %10 = vector.broadcast %cst_3 : f32 to vector<8x1xf32>
    %11 = arith.divf %9, %10 : vector<8x1xf32>
    %c0_4 = arith.constant 0 : index
    %c0_5 = arith.constant 0 : index
    %12 = vector.load %arg2[%c0_4, %c0_5] : memref<2x768xf32, #tpu.memory_space<vmem>>, vector<1x256xf32>
    %c1 = arith.constant 1 : index
    %c0_6 = arith.constant 0 : index
    %13 = vector.load %arg2[%c1, %c0_6] : memref<2x768xf32, #tpu.memory_space<vmem>>, vector<1x256xf32>
    %14 = vector.broadcast %4 : vector<8x1xf32> to vector<8x256xf32>
    %15 = arith.subf %0, %14 : vector<8x256xf32>
    %16 = vector.broadcast %12 : vector<1x256xf32> to vector<8x256xf32>
    %17 = arith.mulf %16, %15 : vector<8x256xf32>
    %cst_7 = arith.constant 9.99999974E-6 : f32
    %18 = vector.broadcast %cst_7 : f32 to vector<8x1xf32>
    %19 = arith.addf %11, %18 : vector<8x1xf32>
    %20 = math.rsqrt %19 : vector<8x1xf32>
    %21 = vector.broadcast %20 : vector<8x1xf32> to vector<8x256xf32>
    %22 = arith.mulf %17, %21 : vector<8x256xf32>
    %23 = vector.broadcast %13 : vector<1x256xf32> to vector<8x256xf32>
    %24 = arith.addf %22, %23 : vector<8x256xf32>
    %25 = arith.truncf %24 : vector<8x256xf32> to vector<8x256xbf16>
    %c0_8 = arith.constant 0 : index
    %c0_9 = arith.constant 0 : index
    %26 = vector.load %arg8[%c0_8, %c0_9] : memref<8x768xbf16, #tpu.memory_space<vmem>>, vector<8x256xbf16>
    tpu.vector_store %arg8[%c0_8, %c0_9], %25 {strides = array<i32>} : memref<8x768xbf16, #tpu.memory_space<vmem>>, vector<8x256xbf16>,
    %c0_10 = arith.constant 0 : index
    %c256 = arith.constant 256 : index
    %27 = vector.load %arg1[%c0_10, %c256] : memref<8x768xf32, #tpu.memory_space<vmem>>, vector<8x256xf32>
    %cst_11 = arith.constant dense<0.000000e+00> : vector<8xf32>
    %28 = vector.multi_reduction <add>, %27, %cst_11 [1] : vector<8x256xf32> to vector<8xf32>
    %29 = vector.shape_cast %28 : vector<8xf32> to vector<8x1xf32>
    %cst_12 = arith.constant 2.560000e+02 : f32
    %30 = vector.broadcast %cst_12 : f32 to vector<8x1xf32>
    %31 = arith.divf %29, %30 : vector<8x1xf32>
    %32 = vector.broadcast %31 : vector<8x1xf32> to vector<8x256xf32>
    %33 = arith.subf %27, %32 : vector<8x256xf32>
    %34 = arith.mulf %33, %33 : vector<8x256xf32>
    %cst_13 = arith.constant dense<0.000000e+00> : vector<8xf32>
    %35 = vector.multi_reduction <add>, %34, %cst_13 [1] : vector<8x256xf32> to vector<8xf32>
    %36 = vector.shape_cast %35 : vector<8xf32> to vector<8x1xf32>
    %cst_14 = arith.constant 2.560000e+02 : f32
    %37 = vector.broadcast %cst_14 : f32 to vector<8x1xf32>
    %38 = arith.divf %36, %37 : vector<8x1xf32>
    %c0_15 = arith.constant 0 : index
    %c256_16 = arith.constant 256 : index
    %39 = vector.load %arg2[%c0_15, %c256_16] : memref<2x768xf32, #tpu.memory_space<vmem>>, vector<1x256xf32>
    %c1_17 = arith.constant 1 : index
    %c256_18 = arith.constant 256 : index
    %40 = vector.load %arg2[%c1_17, %c256_18] : memref<2x768xf32, #tpu.memory_space<vmem>>, vector<1x256xf32>
    %41 = vector.broadcast %31 : vector<8x1xf32> to vector<8x256xf32>
    %42 = arith.subf %27, %41 : vector<8x256xf32>
    %43 = vector.broadcast %39 : vector<1x256xf32> to vector<8x256xf32>
    %44 = arith.mulf %43, %42 : vector<8x256xf32>
    %cst_19 = arith.constant 9.99999974E-6 : f32
    %45 = vector.broadcast %cst_19 : f32 to vector<8x1xf32>
    %46 = arith.addf %38, %45 : vector<8x1xf32>
    %47 = math.rsqrt %46 : vector<8x1xf32>
    %48 = vector.broadcast %47 : vector<8x1xf32> to vector<8x256xf32>
    %49 = arith.mulf %44, %48 : vector<8x256xf32>
    %50 = vector.broadcast %40 : vector<1x256xf32> to vector<8x256xf32>
    %51 = arith.addf %49, %50 : vector<8x256xf32>
    %52 = arith.truncf %51 : vector<8x256xf32> to vector<8x256xbf16>
    %c0_20 = arith.constant 0 : index
    %c256_21 = arith.constant 256 : index
    %53 = vector.load %arg8[%c0_20, %c256_21] : memref<8x768xbf16, #tpu.memory_space<vmem>>, vector<8x256xbf16>
    tpu.vector_store %arg8[%c0_20, %c256_21], %52 {strides = array<i32>} : memref<8x768xbf16, #tpu.memory_space<vmem>>, vector<8x256xbf16>,
    %c0_22 = arith.constant 0 : index
    %c512 = arith.constant 512 : index
    %54 = vector.load %arg1[%c0_22, %c512] : memref<8x768xf32, #tpu.memory_space<vmem>>, vector<8x256xf32>
    %cst_23 = arith.constant dense<0.000000e+00> : vector<8xf32>
    %55 = vector.multi_reduction <add>, %54, %cst_23 [1] : vector<8x256xf32> to vector<8xf32>
    %56 = vector.shape_cast %55 : vector<8xf32> to vector<8x1xf32>
    %cst_24 = arith.constant 2.560000e+02 : f32
    %57 = vector.broadcast %cst_24 : f32 to vector<8x1xf32>
    %58 = arith.divf %56, %57 : vector<8x1xf32>
    %59 = vector.broadcast %58 : vector<8x1xf32> to vector<8x256xf32>
    %60 = arith.subf %54, %59 : vector<8x256xf32>
    %61 = arith.mulf %60, %60 : vector<8x256xf32>
    %cst_25 = arith.constant dense<0.000000e+00> : vector<8xf32>
    %62 = vector.multi_reduction <add>, %61, %cst_25 [1] : vector<8x256xf32> to vector<8xf32>
    %63 = vector.shape_cast %62 : vector<8xf32> to vector<8x1xf32>
    %cst_26 = arith.constant 2.560000e+02 : f32
    %64 = vector.broadcast %cst_26 : f32 to vector<8x1xf32>
    %65 = arith.divf %63, %64 : vector<8x1xf32>
    %c0_27 = arith.constant 0 : index
    %c512_28 = arith.constant 512 : index
    %66 = vector.load %arg2[%c0_27, %c512_28] : memref<2x768xf32, #tpu.memory_space<vmem>>, vector<1x256xf32>
    %c1_29 = arith.constant 1 : index
    %c512_30 = arith.constant 512 : index
    %67 = vector.load %arg2[%c1_29, %c512_30] : memref<2x768xf32, #tpu.memory_space<vmem>>, vector<1x256xf32>
    %68 = vector.broadcast %58 : vector<8x1xf32> to vector<8x256xf32>
    %69 = arith.subf %54, %68 : vector<8x256xf32>
    %70 = vector.broadcast %66 : vector<1x256xf32> to vector<8x256xf32>
    %71 = arith.mulf %70, %69 : vector<8x256xf32>
    %cst_31 = arith.constant 9.99999974E-6 : f32
    %72 = vector.broadcast %cst_31 : f32 to vector<8x1xf32>
    %73 = arith.addf %65, %72 : vector<8x1xf32>
    %74 = math.rsqrt %73 : vector<8x1xf32>
    %75 = vector.broadcast %74 : vector<8x1xf32> to vector<8x256xf32>
    %76 = arith.mulf %71, %75 : vector<8x256xf32>
    %77 = vector.broadcast %67 : vector<1x256xf32> to vector<8x256xf32>
    %78 = arith.addf %76, %77 : vector<8x256xf32>
    %79 = arith.truncf %78 : vector<8x256xf32> to vector<8x256xbf16>
    %c0_32 = arith.constant 0 : index
    %c512_33 = arith.constant 512 : index
    %80 = vector.load %arg8[%c0_32, %c512_33] : memref<8x768xbf16, #tpu.memory_space<vmem>>, vector<8x256xbf16>
    tpu.vector_store %arg8[%c0_32, %c512_33], %79 {strides = array<i32>} : memref<8x768xbf16, #tpu.memory_space<vmem>>, vector<8x256xbf16>,
    %c0_34 = arith.constant 0 : index
    %c0_35 = arith.constant 0 : index
    %81 = vector.load %arg3[%c0_34, %c0_35] : memref<1x1152xf32, #tpu.memory_space<vmem>>, vector<1x512xf32>
    %c0_36 = arith.constant 0 : index
    %c512_37 = arith.constant 512 : index
    %82 = vector.load %arg3[%c0_36, %c512_37] : memref<1x1152xf32, #tpu.memory_space<vmem>>, vector<1x256xf32>
    %c0_38 = arith.constant 0 : index
    %c768 = arith.constant 768 : index
    %83 = vector.load %arg3[%c0_38, %c768] : memref<1x1152xf32, #tpu.memory_space<vmem>>, vector<1x128xf32>
    %c0_39 = arith.constant 0 : index
    %c896 = arith.constant 896 : index
    %84 = vector.load %arg3[%c0_39, %c896] : memref<1x1152xf32, #tpu.memory_space<vmem>>, vector<1x128xf32>
    %c0_40 = arith.constant 0 : index
    %c1024 = arith.constant 1024 : index
    %85 = vector.load %arg3[%c0_40, %c1024] : memref<1x1152xf32, #tpu.memory_space<vmem>>, vector<1x128xf32>
    %c0_41 = arith.constant 0 : index
    %c0_42 = arith.constant 0 : index
    %86 = vector.load %arg6[%c0_41, %c0_42] : memref<512x128xbf16, #tpu.memory_space<vmem>>, vector<256x128xbf16>
    %c256_43 = arith.constant 256 : index
    %c0_44 = arith.constant 0 : index
    %87 = vector.load %arg6[%c256_43, %c0_44] : memref<512x128xbf16, #tpu.memory_space<vmem>>, vector<128x128xbf16>
    %c384 = arith.constant 384 : index
    %c0_45 = arith.constant 0 : index
    %88 = vector.load %arg6[%c384, %c0_45] : memref<512x128xbf16, #tpu.memory_space<vmem>>, vector<128x128xbf16>
    %c0_46 = arith.constant 0 : index
    %c0_47 = arith.constant 0 : index
    %89 = vector.load %arg8[%c0_46, %c0_47] : memref<8x768xbf16, #tpu.memory_space<vmem>>, vector<8x768xbf16>
    %c0_48 = arith.constant 0 : index
    %c0_49 = arith.constant 0 : index
    %90 = vector.load %arg4[%c0_48, %c0_49] : memref<768x512xbf16, #tpu.memory_space<vmem>>, vector<768x512xbf16>
    %cst_50 = arith.constant dense<0.000000e+00> : vector<8x512xf32>
    %91 = tpu.matmul %89, %90, %cst_50 {dimension_numbers = #tpu.dot_dimension_numbers<[1], [0], [0], [1], [0, 0, 1, 1], [], []>} : vector<8x768xbf16>, vector<768x512xbf16>, vector<8x512xf32> -> vector<8x512xf32>
    %92 = vector.broadcast %81 : vector<1x512xf32> to vector<8x512xf32>
    %93 = arith.addf %91, %92 : vector<8x512xf32>
    %cst_51 = arith.constant 0.000000e+00 : f32
    %94 = vector.broadcast %cst_51 : f32 to vector<8x512xf32>
    %95 = arith.maximumf %93, %94 : vector<8x512xf32>
    %96 = arith.truncf %95 : vector<8x512xf32> to vector<8x512xbf16>
    %c0_52 = arith.constant 0 : index
    %c0_53 = arith.constant 0 : index
    %97 = vector.load %arg5[%c0_52, %c0_53] : memref<512x256xbf16, #tpu.memory_space<vmem>>, vector<512x256xbf16>
    %cst_54 = arith.constant dense<0.000000e+00> : vector<8x256xf32>
    %98 = tpu.matmul %96, %97, %cst_54 {dimension_numbers = #tpu.dot_dimension_numbers<[1], [0], [0], [1], [0, 0, 1, 1], [], []>} : vector<8x512xbf16>, vector<512x256xbf16>, vector<8x256xf32> -> vector<8x256xf32>
    %99 = vector.broadcast %82 : vector<1x256xf32> to vector<8x256xf32>
    %100 = arith.addf %98, %99 : vector<8x256xf32>
    %cst_55 = arith.constant 0.000000e+00 : f32
    %101 = vector.broadcast %cst_55 : f32 to vector<8x256xf32>
    %102 = arith.maximumf %100, %101 : vector<8x256xf32>
    %103 = arith.truncf %102 : vector<8x256xf32> to vector<8x256xbf16>
    %cst_56 = arith.constant dense<0.000000e+00> : vector<8x128xf32>
    %104 = tpu.matmul %103, %86, %cst_56 {dimension_numbers = #tpu.dot_dimension_numbers<[1], [0], [0], [1], [0, 0, 1, 1], [], []>} : vector<8x256xbf16>, vector<256x128xbf16>, vector<8x128xf32> -> vector<8x128xf32>
    %105 = vector.broadcast %83 : vector<1x128xf32> to vector<8x128xf32>
    %106 = arith.addf %104, %105 : vector<8x128xf32>
    %cst_57 = arith.constant 0.000000e+00 : f32
    %107 = vector.broadcast %cst_57 : f32 to vector<8x128xf32>
    %108 = arith.maximumf %106, %107 : vector<8x128xf32>
    %109 = arith.truncf %108 : vector<8x128xf32> to vector<8x128xbf16>
    %cst_58 = arith.constant dense<0.000000e+00> : vector<8x128xf32>
    %110 = tpu.matmul %109, %87, %cst_58 {dimension_numbers = #tpu.dot_dimension_numbers<[1], [0], [0], [1], [0, 0, 1, 1], [], []>} : vector<8x128xbf16>, vector<128x128xbf16>, vector<8x128xf32> -> vector<8x128xf32>
    %111 = vector.broadcast %84 : vector<1x128xf32> to vector<8x128xf32>
    %112 = arith.addf %110, %111 : vector<8x128xf32>
    %cst_59 = arith.constant 0.000000e+00 : f32
    %113 = vector.broadcast %cst_59 : f32 to vector<8x128xf32>
    %114 = arith.maximumf %112, %113 : vector<8x128xf32>
    %115 = arith.truncf %114 : vector<8x128xf32> to vector<8x128xbf16>
    %cst_60 = arith.constant dense<0.000000e+00> : vector<8x128xf32>
    %116 = tpu.matmul %115, %88, %cst_60 {dimension_numbers = #tpu.dot_dimension_numbers<[1], [0], [0], [1], [0, 0, 1, 1], [], []>} : vector<8x128xbf16>, vector<128x128xbf16>, vector<8x128xf32> -> vector<8x128xf32>
    %117 = vector.broadcast %85 : vector<1x128xf32> to vector<8x128xf32>
    %118 = arith.addf %116, %117 : vector<8x128xf32>
    %cst_61 = arith.constant 0.000000e+00 : f32
    %119 = vector.broadcast %cst_61 : f32 to vector<8x128xf32>
    %120 = arith.maximumf %118, %119 : vector<8x128xf32>
    %121 = tpu.iota {dimensions = array<i32: 1>} : vector<8x128xi32>
    %c8_i32 = arith.constant 8 : i32
    %122 = vector.broadcast %c8_i32 : i32 to vector<8x128xi32>
    %123 = arith.cmpi slt, %121, %122 : vector<8x128xi32>
    %cst_62 = arith.constant -1.000000e+30 : f32
    %124 = vector.broadcast %cst_62 : f32 to vector<8x128xf32>
    %125 = arith.select %123, %120, %124 : vector<8x128xi1>, vector<8x128xf32>
    %cst_63 = arith.constant dense<0xFF800000> : vector<8xf32>
    %126 = vector.multi_reduction <maximumf>, %125, %cst_63 [1] : vector<8x128xf32> to vector<8xf32>
    %127 = vector.shape_cast %126 : vector<8xf32> to vector<8x1xf32>
    %128 = vector.broadcast %127 : vector<8x1xf32> to vector<8x128xf32>
    %129 = arith.subf %125, %128 : vector<8x128xf32>
    %130 = math.exp %129 : vector<8x128xf32>
    %cst_64 = arith.constant dense<0.000000e+00> : vector<8xf32>
    %131 = vector.multi_reduction <add>, %130, %cst_64 [1] : vector<8x128xf32> to vector<8xf32>
    %132 = vector.shape_cast %131 : vector<8xf32> to vector<8x1xf32>
    %133 = vector.broadcast %132 : vector<8x1xf32> to vector<8x128xf32>
    %134 = arith.divf %130, %133 : vector<8x128xf32>
    %c0_65 = arith.constant 0 : index
    %c0_66 = arith.constant 0 : index
    %135 = vector.load %arg7[%c0_65, %c0_66] : memref<8x128xf32, #tpu.memory_space<vmem>>, vector<8x128xf32>
    tpu.vector_store %arg7[%c0_65, %c0_66], %134 {strides = array<i32>} : memref<8x128xf32, #tpu.memory_space<vmem>>, vector<8x128xf32>,
    return
  }
  func.func @transform_0(%arg0: i32) -> (i32, i32) {
    %c0_i32 = arith.constant 0 : i32
    %c0_i32_0 = arith.constant 0 : i32
    return %arg0, %c0_i32 : i32, i32
  }
  func.func @transform_1(%arg0: i32) -> (i32, i32) {
    %c0_i32 = arith.constant 0 : i32
    %c0_i32_0 = arith.constant 0 : i32
    %c0_i32_1 = arith.constant 0 : i32
    return %c0_i32, %c0_i32_0 : i32, i32
  }
  func.func @transform_2(%arg0: i32) -> (i32, i32) {
    %c0_i32 = arith.constant 0 : i32
    %c0_i32_0 = arith.constant 0 : i32
    %c0_i32_1 = arith.constant 0 : i32
    return %c0_i32, %c0_i32_0 : i32, i32
  }
  func.func @transform_3(%arg0: i32) -> (i32, i32) {
    %c0_i32 = arith.constant 0 : i32
    %c0_i32_0 = arith.constant 0 : i32
    %c0_i32_1 = arith.constant 0 : i32
    return %c0_i32, %c0_i32_0 : i32, i32
  }
  func.func @transform_4(%arg0: i32) -> (i32, i32) {
    %c0_i32 = arith.constant 0 : i32
    %c0_i32_0 = arith.constant 0 : i32
    %c0_i32_1 = arith.constant 0 : i32
    return %c0_i32, %c0_i32_0 : i32, i32
  }
  func.func @transform_5(%arg0: i32) -> (i32, i32) {
    %c0_i32 = arith.constant 0 : i32
    %c0_i32_0 = arith.constant 0 : i32
    %c0_i32_1 = arith.constant 0 : i32
    return %c0_i32, %c0_i32_0 : i32, i32
  }
  func.func @transform_6(%arg0: i32) -> (i32, i32) {
    %c0_i32 = arith.constant 0 : i32
    %c0_i32_0 = arith.constant 0 : i32
    return %arg0, %c0_i32 : i32, i32
  }
}

</mosaic_0001>

<llo_original>
// kernel: actor_forward.1
$region0: #{actor_forward.1}
  #allocation0 [shape = 'u32[]', space=smem, size = 0x4, offset = 0x4, fixed_abs, tag = 'smem constant byte address 0x4 - core index']
  #allocation1 [shape = 'u32[144,128]{1,0:T(1,128)}', space=vmem, size = 0x12000, scoped, tag = 'internal scratch']
  #allocation2 [shape = 'bf16[8,768]{1,0:T(8,128)(2,1)}', space=vmem, size = 0x3000, scoped, tag = 'scratch operand']
  %s0 = inlined_call_operand.vmem [shape: f32[16,768], index: 0, kind: input, shape index: {}]
  %s1 = inlined_call_operand.vmem [shape: f32[2,768], index: 1, kind: input, shape index: {}]
  %s2 = inlined_call_operand.vmem [shape: f32[1,1152], index: 2, kind: input, shape index: {}]
  %s3 = inlined_call_operand.hbm [shape: bf16[768,512], index: 3, kind: input, shape index: {}]
  %s4 = inlined_call_operand.vmem [shape: bf16[512,256], index: 4, kind: input, shape index: {}]
  %s5 = inlined_call_operand.vmem [shape: bf16[512,128], index: 5, kind: input, shape index: {}]
  %s6 = inlined_call_operand.vmem [shape: f32[16,128], index: 6, kind: output, shape index: {}]
  %s7 = sld [smem:[#allocation0]]
  $region61: #{actor_forward.1} parent=0
    _
  %s9 = ssub.s32 1, %s7
  %s10 = scalar_select 0, %s9, %s7
  $region1: #{actor_forward.1} parent=0
    #allocation3 [shape = 'u8[786432]{0}', space=vmem, size = 0xc0000, scoped, tag = 'input window, operand 3, single buffered']
    #allocation4 [shape = 's32[2]{0}', space=sflag, size = 0x8, scoped, tag = 'scoped memory for actor_forward.1']
    %11 = vsyncpa [#allocation4], 0
    loop: start=0, step=1, limit=4
    $region2: #{actor_forward.1} parent=1 // loop_pre_header
      _
    $region3: #{actor_forward.1} parent=1 // loop_header
      %s13 = sphi 0, %s17
      %p14 = scmp.ge.s32.totalorder %s13, 4
      %s23 = sphi 0, %s25
      %s26 = sphi 0, %s23
      %s27 = sphi 0, %s26
      %s43 = sphi 0, %s27
      %s47 = sphi 0, %s47
      %s49 = sphi 0, %s47
      %s50 = sphi 0, %s49
      %s64 = sphi 0, %s50
      %s68 = sphi 0, %s68
      %s70 = sphi 0, %s68
      %s71 = sphi 0, %s70
      %s85 = sphi 0, %s71
      %s89 = sphi 0, %s89
      %s91 = sphi 0, %s89
      %s92 = sphi 0, %s91
      %s106 = sphi 0, %s92
      %s110 = sphi 0, %s110
      %s112 = sphi 0, %s110
      %s113 = sphi 0, %s112
      %s127 = sphi 0, %s113
      %s131 = sphi 0, %s131
      %s133 = sphi 0, %s131
      %s134 = sphi 0, %s133
      %s148 = sphi 0, %s134
      %s154 = sphi 0, %s156
      %s157 = sphi 0, %s154
      %s158 = sphi 0, %s157
      %s174 = sphi 0, %s158
    $region4: #{actor_forward.1} parent=1 // loop_header_branch
      %16 = sbr.rel (%p14) target = $region8
    $region5: #{actor_forward.1} parent=1 // loop_body
      %s18 = ssub.s32 %s13, 1
      %s19 = ssub.s32 %s13, 2
      %s20 = sadd.s32 %s13, 1
      %s21 = ssub.s32 %s13, %s20
      %p22 = scmp.eq.s32.totalorder %s21, 0
      %s24 = sadd.s32 %s23, 1
      %s25 = scalar_select %p22, %s23, %s24
      %p28 = pneg %p22
      %p29 = scmp.eq.s32.totalorder %s13, 1
      %p30 = por %p28, %p29
      %p31 = scmp.ne.s32.totalorder %s23, %s26
      %p32 = scmp.eq.s32.totalorder %s13, 0
      %p33 = por %p31, %p32
      %p34 = scmp.ne.s32.totalorder %s23, %s26
      %p35 = scmp.eq.s32.totalorder %s18, 1
      %p36 = por %p34, %p35
      %p37 = scmp.ne.s32.totalorder %s26, %s27
      %p38 = scmp.eq.s32.totalorder %s18, 0
      %p39 = por %p37, %p38
      %p40 = scmp.ne.s32.totalorder %s26, %s27
      %p41 = scmp.eq.s32.totalorder %s19, 1
      %p42 = por %p40, %p41
      %p44 = scmp.ne.s32.totalorder %s27, %s43
      %p45 = scmp.eq.s32.totalorder %s19, 0
      %p46 = por %p44, %p45
      %s48 = sadd.s32 %s47, 1
      %p51 = scmp.eq.s32.totalorder %s13, 1
      %p52 = scmp.ne.s32.totalorder %s47, %s49
      %p53 = scmp.eq.s32.totalorder %s13, 0
      %p54 = por %p52, %p53
      %p55 = scmp.ne.s32.totalorder %s47, %s49
      %p56 = scmp.eq.s32.totalorder %s18, 1
      %p57 = por %p55, %p56
      %p58 = scmp.ne.s32.totalorder %s49, %s50
      %p59 = scmp.eq.s32.totalorder %s18, 0
      %p60 = por %p58, %p59
      %p61 = scmp.ne.s32.totalorder %s49, %s50
      %p62 = scmp.eq.s32.totalorder %s19, 1
      %p63 = por %p61, %p62
      %p65 = scmp.ne.s32.totalorder %s50, %s64
      %p66 = scmp.eq.s32.totalorder %s19, 0
      %p67 = por %p65, %p66
      %s69 = sadd.s32 %s68, 1
      %p72 = scmp.eq.s32.totalorder %s13, 1
      %p73 = scmp.ne.s32.totalorder %s68, %s70
      %p74 = scmp.eq.s32.totalorder %s13, 0
      %p75 = por %p73, %p74
      %p76 = scmp.ne.s32.totalorder %s68, %s70
      %p77 = scmp.eq.s32.totalorder %s18, 1
      %p78 = por %p76, %p77
      %p79 = scmp.ne.s32.totalorder %s70, %s71
      %p80 = scmp.eq.s32.totalorder %s18, 0
      %p81 = por %p79, %p80
      %p82 = scmp.ne.s32.totalorder %s70, %s71
      %p83 = scmp.eq.s32.totalorder %s19, 1
      %p84 = por %p82, %p83
      %p86 = scmp.ne.s32.totalorder %s71, %s85
      %p87 = scmp.eq.s32.totalorder %s19, 0
      %p88 = por %p86, %p87
      %s90 = sadd.s32 %s89, 1
      %p93 = scmp.eq.s32.totalorder %s13, 1
      %p94 = scmp.ne.s32.totalorder %s89, %s91
      %p95 = scmp.eq.s32.totalorder %s13, 0
      %p96 = por %p94, %p95
      %p97 = scmp.ne.s32.totalorder %s89, %s91
      %p98 = scmp.eq.s32.totalorder %s18, 1
      %p99 = por %p97, %p98
      %p100 = scmp.ne.s32.totalorder %s91, %s92
      %p101 = scmp.eq.s32.totalorder %s18, 0
      %p102 = por %p100, %p101
      %p103 = scmp.ne.s32.totalorder %s91, %s92
      %p104 = scmp.eq.s32.totalorder %s19, 1
      %p105 = por %p103, %p104
      %p107 = scmp.ne.s32.totalorder %s92, %s106
      %p108 = scmp.eq.s32.totalorder %s19, 0
      %p109 = por %p107, %p108
      %s111 = sadd.s32 %s110, 1
      %p114 = scmp.eq.s32.totalorder %s13, 1
      %p115 = scmp.ne.s32.totalorder %s110, %s112
      %p116 = scmp.eq.s32.totalorder %s13, 0
      %p117 = por %p115, %p116
      %p118 = scmp.ne.s32.totalorder %s110, %s112
      %p119 = scmp.eq.s32.totalorder %s18, 1
      %p120 = por %p118, %p119
      %p121 = scmp.ne.s32.totalorder %s112, %s113
      %p122 = scmp.eq.s32.totalorder %s18, 0
      %p123 = por %p121, %p122
      %p124 = scmp.ne.s32.totalorder %s112, %s113
      %p125 = scmp.eq.s32.totalorder %s19, 1
      %p126 = por %p124, %p125
      %p128 = scmp.ne.s32.totalorder %s113, %s127
      %p129 = scmp.eq.s32.totalorder %s19, 0
      %p130 = por %p128, %p129
      %s132 = sadd.s32 %s131, 1
      %p135 = scmp.eq.s32.totalorder %s13, 1
      %p136 = scmp.ne.s32.totalorder %s131, %s133
      %p137 = scmp.eq.s32.totalorder %s13, 0
      %p138 = por %p136, %p137
      %p139 = scmp.ne.s32.totalorder %s131, %s133
      %p140 = scmp.eq.s32.totalorder %s18, 1
      %p141 = por %p139, %p140
      %p142 = scmp.ne.s32.totalorder %s133, %s134
      %p143 = scmp.eq.s32.totalorder %s18, 0
      %p144 = por %p142, %p143
      %p145 = scmp.ne.s32.totalorder %s133, %s134
      %p146 = scmp.eq.s32.totalorder %s19, 1
      %p147 = por %p145, %p146
      %p149 = scmp.ne.s32.totalorder %s134, %s148
      %p150 = scmp.eq.s32.totalorder %s19, 0
      %p151 = por %p149, %p150
      %s152 = ssub.s32 %s13, %s20
      %p153 = scmp.eq.s32.totalorder %s152, 0
      %s155 = sadd.s32 %s154, 1
      %s156 = scalar_select %p153, %s154, %s155
      %p159 = pneg %p153
      %p160 = scmp.eq.s32.totalorder %s13, 1
      %p161 = por %p159, %p160
      %p162 = scmp.ne.s32.totalorder %s154, %s157
      %p163 = scmp.eq.s32.totalorder %s13, 0
      %p164 = por %p162, %p163
      %p165 = scmp.ne.s32.totalorder %s154, %s157
      %p166 = scmp.eq.s32.totalorder %s18, 1
      %p167 = por %p165, %p166
      %p168 = scmp.ne.s32.totalorder %s157, %s158
      %p169 = scmp.eq.s32.totalorder %s18, 0
      %p170 = por %p168, %p169
      %p171 = scmp.ne.s32.totalorder %s157, %s158
      %p172 = scmp.eq.s32.totalorder %s19, 1
      %p173 = por %p171, %p172
      %p175 = scmp.ne.s32.totalorder %s158, %s174
      %p176 = scmp.eq.s32.totalorder %s19, 0
      %p177 = por %p175, %p176
      %p178 = scmp.le.s32.totalorder 1, %s13
      %p179 = scmp.lt.s32.totalorder %s13, 3
      %p180 = pnand %p178, %p179
      %p181 = pneg %p180
      // Predicated region
      $region9: #{actor_forward.1} parent=5 // pred_check
        _
      $region10: #{actor_forward.1} parent=5 // pred_check_branch
        %183 = sbr.rel (%p180) target = $region12
      $region11: #{actor_forward.1} parent=5 // pred_region
        %s184 = ssub.s32 %s13, 1
        // Predicated region
        $region13: #{actor_forward.1} parent=11 // pred_check
          %p185 = pneg %p60
        $region14: #{actor_forward.1} parent=11 // pred_check_branch
          %187 = sbr.rel (%p185) target = $region16
        $region15: #{actor_forward.1} parent=11 // pred_region
          _
        $region16: #{actor_forward.1} parent=11 // pred_fallthru
          _
        // Predicated region
        $region17: #{actor_forward.1} parent=11 // pred_check
          %p188 = pneg %p81
        $region18: #{actor_forward.1} parent=11 // pred_check_branch
          %190 = sbr.rel (%p188) target = $region20
        $region19: #{actor_forward.1} parent=11 // pred_region
          _
        $region20: #{actor_forward.1} parent=11 // pred_fallthru
          _
        // Predicated region
        $region21: #{actor_forward.1} parent=11 // pred_check
          %p191 = pneg %p102
        $region22: #{actor_forward.1} parent=11 // pred_check_branch
          %193 = sbr.rel (%p191) target = $region24
        $region23: #{actor_forward.1} parent=11 // pred_region
          %s195 = ssub.s32 24576, 24576
          %196 = vsyncadd [#allocation4], %s195
          %s197 = sshll.u32 [#allocation3], 4
          %s198 = int_to_ptr.vmem [resolvable:$true] %s197
          %203 = dma.hbm_to_vmem [thread:$0]  %s3, 24576, %s198, [#allocation4], 256, 256, 16
        $region24: #{actor_forward.1} parent=11 // pred_fallthru
          _
        // Predicated region
        $region25: #{actor_forward.1} parent=11 // pred_check
          %p204 = pneg %p123
        $region26: #{actor_forward.1} parent=11 // pred_check_branch
          %206 = sbr.rel (%p204) target = $region28
        $region27: #{actor_forward.1} parent=11 // pred_region
          _
        $region28: #{actor_forward.1} parent=11 // pred_fallthru
          _
        // Predicated region
        $region29: #{actor_forward.1} parent=11 // pred_check
          %p207 = pneg %p144
        $region30: #{actor_forward.1} parent=11 // pred_check_branch
          %209 = sbr.rel (%p207) target = $region32
        $region31: #{actor_forward.1} parent=11 // pred_region
          _
        $region32: #{actor_forward.1} parent=11 // pred_fallthru
          _
      $region12: #{actor_forward.1} parent=5 // pred_fallthru
        _
      %p210 = scmp.lt.s32.totalorder %s13, 2
      // Predicated region
      $region33: #{actor_forward.1} parent=5 // pred_check
        %p211 = pneg %p210
      $region34: #{actor_forward.1} parent=5 // pred_check_branch
        %213 = sbr.rel (%p211) target = $region36
      $region35: #{actor_forward.1} parent=5 // pred_region
        // Predicated region
        $region37: #{actor_forward.1} parent=35 // pred_check
          %p214 = pneg %p33
        $region38: #{actor_forward.1} parent=35 // pred_check_branch
          %216 = sbr.rel (%p214) target = $region40
        $region39: #{actor_forward.1} parent=35 // pred_region
          %p217 = scmp.lt.s32.totalorder %s13, 1
          %s218 = scalar_select %p217, %s13, 1
          %s219 = smul.addr %s218, 6
          %s220 = smul.addr %s219, 8
          %s221 = scalar_lea.vmem %s0, %s220
        $region40: #{actor_forward.1} parent=35 // pred_fallthru
          _
      $region36: #{actor_forward.1} parent=5 // pred_fallthru
        _
      %p222 = scmp.le.s32.totalorder 1, %s13
      %p223 = scmp.lt.s32.totalorder %s13, 3
      %p224 = pnand %p222, %p223
      %p225 = pneg %p224
      // Predicated region
      $region41: #{actor_forward.1} parent=5 // pred_check
        _
      $region42: #{actor_forward.1} parent=5 // pred_check_branch
        %227 = sbr.rel (%p224) target = $region44
      $region43: #{actor_forward.1} parent=5 // pred_region
        %s228 = ssub.s32 %s13, 1
        // Predicated region
        $region45: #{actor_forward.1} parent=43 // pred_check
          %p229 = pneg %p102
        $region46: #{actor_forward.1} parent=43 // pred_check_branch
          %231 = sbr.rel (%p229) target = $region48
        $region47: #{actor_forward.1} parent=43 // pred_region
          %232 = dma.done [#allocation4], 24576
        $region48: #{actor_forward.1} parent=43 // pred_fallthru
          _
        %p233 = scmp.lt.s32.totalorder %s18, 1
        %s234 = scalar_select %p233, %s18, 1
        %s235 = smul.addr %s234, 6
        %s236 = smul.addr %s235, 8
        %s237 = scalar_lea.vmem %s0, %s236
        %p238 = pneg %p39
        %p239 = pneg %p36
        %p240 = pneg %p60
        %p241 = pneg %p57
        %p242 = pneg %p81
        %p243 = pneg %p78
        %p244 = pneg %p102
        %p245 = pneg %p99
        %p246 = pneg %p123
        %p247 = pneg %p120
        %p248 = pneg %p144
        %p249 = pneg %p141
        %p250 = pneg %p170
        %p251 = pneg %p167
        %p252 = scmp.lt.s32.totalorder %s18, 1
        %s253 = scalar_select %p252, %s18, 1
        %s254 = smul.addr %s253, 8
        %s255 = scalar_lea.vmem %s6, %s254
        %p256 = scmp.lt.s32.totalorder %s18, 1
        %s257 = scalar_select %p256, %s18, 1
        %s258 = smul.addr %s257, 6
        %s259 = smul.addr %s258, 8
        %s260 = scalar_lea.vmem %s0, %s259
        %p261 = scmp.lt.s32.totalorder %s18, 1
        %s262 = scalar_select %p261, %s18, 1
        %s263 = smul.addr %s262, 8
        %s264 = scalar_lea.vmem %s6, %s263
        %v266 = vld [vmem:[%s260] sm:$0xff]
        %v267 = vld [vmem:[%s260 + $0x8] sm:$0xff]
        %v268 = vadd.f32 %v266, %v267
        %269 = vadd.xlane.f32.xlu0 %v268
        %v270 = vpop.xlane.xlu0 %269
        %v271 = vrcp.pop 256.0
        %v272 = vmul.f32 %v270, %v271
        %v273 = vsub.f32 %v266, %v272
        %v274 = vsub.f32 %v267, %v272
        %v275 = vmul.f32 %v273, %v273
        %v276 = vmul.f32 %v274, %v274
        %v277 = vadd.f32 %v275, %v276
        %278 = vadd.xlane.f32.xlu0 %v277
        %v279 = vpop.xlane.xlu0 %278
        %v280 = vmul.f32 %v279, %v271
        %v281 = vld [vmem:[%s1] ss:$2 sm:$0x3]
        %s282 = scalar_lea.vmem %s1, 1
        %v283 = vld [vmem:[%s282] ss:$2 sm:$0x3]
        %v285 = vlaneseq
        %v286 = vshrl.u32 %v285, 7
        %v287 = vsub.s32 0, %v286
        %v288 = vrot.slane %v281, %v287
        %v289 = vlaneseq
        %v290 = vshrl.u32 %v289, 7
        %v291 = vsub.s32 1, %v290
        %v292 = vrot.slane %v281, %v291
        %v295 = vmul.f32 %v288, %v273
        %v296 = vmul.f32 %v292, %v274
        %v297 = vadd.f32 %v280, 1e-05
        %v298 = vrsqrt.pop %v297
        %v299 = vmul.f32 %v295, %v298
        %v300 = vmul.f32 %v296, %v298
        %v302 = vlaneseq
        %v303 = vshrl.u32 %v302, 7
        %v304 = vsub.s32 0, %v303
        %v305 = vrot.slane %v283, %v304
        %v306 = vlaneseq
        %v307 = vshrl.u32 %v306, 7
        %v308 = vsub.s32 1, %v307
        %v309 = vrot.slane %v283, %v308
        %v312 = vadd.f32 %v299, %v305
        %v313 = vadd.f32 %v300, %v309
        %v314 = vpack.c.bf16 %v312, %v312
        %v315 = vpack.c.bf16 %v313, %v313
        %v318 = vunpack.c.l.b16 %v314
        %v319 = vunpack.c.l.b16 %v315
        %v320 = vpack.c.b16 %v319, %v318
        %322 = vst [vmem:[#allocation2] sm:$0xff] %v320
        %v323 = vld [vmem:[%s260 + $0x10] sm:$0xff]
        %v324 = vld [vmem:[%s260 + $0x18] sm:$0xff]
        %v325 = vadd.f32 %v323, %v324
        %326 = vadd.xlane.f32.xlu0 %v325
        %v327 = vpop.xlane.xlu0 %326
        %v328 = vmul.f32 %v327, %v271
        %v329 = vsub.f32 %v323, %v328
        %v330 = vsub.f32 %v324, %v328
        %v331 = vmul.f32 %v329, %v329
        %v332 = vmul.f32 %v330, %v330
        %v333 = vadd.f32 %v331, %v332
        %334 = vadd.xlane.f32.xlu0 %v333
        %v335 = vpop.xlane.xlu0 %334
        %v336 = vmul.f32 %v335, %v271
        %s337 = scalar_lea.vmem %s1, 4
        %v338 = vld [vmem:[%s337] ss:$2 sm:$0x3]
        %s339 = scalar_lea.vmem %s1, 5
        %v340 = vld [vmem:[%s339] ss:$2 sm:$0x3]
        %v342 = vlaneseq
        %v343 = vshrl.u32 %v342, 7
        %v344 = vsub.s32 0, %v343
        %v345 = vrot.slane %v338, %v344
        %v346 = vlaneseq
        %v347 = vshrl.u32 %v346, 7
        %v348 = vsub.s32 1, %v347
        %v349 = vrot.slane %v338, %v348
        %v352 = vmul.f32 %v345, %v329
        %v353 = vmul.f32 %v349, %v330
        %v354 = vadd.f32 %v336, 1e-05
        %v355 = vrsqrt.pop %v354
        %v356 = vmul.f32 %v352, %v355
        %v357 = vmul.f32 %v353, %v355
        %v359 = vlaneseq
        %v360 = vshrl.u32 %v359, 7
        %v361 = vsub.s32 0, %v360
        %v362 = vrot.slane %v340, %v361
        %v363 = vlaneseq
        %v364 = vshrl.u32 %v363, 7
        %v365 = vsub.s32 1, %v364
        %v366 = vrot.slane %v340, %v365
        %v369 = vadd.f32 %v356, %v362
        %v370 = vadd.f32 %v357, %v366
        %v371 = vpack.c.bf16 %v369, %v369
        %v372 = vpack.c.bf16 %v370, %v370
        %v375 = vunpack.c.l.b16 %v371
        %v376 = vunpack.c.l.b16 %v372
        %v377 = vpack.c.b16 %v376, %v375
        %379 = vst [vmem:[#allocation2 + $0x8] sm:$0xff] %v377
        %v380 = vld [vmem:[%s260 + $0x20] sm:$0xff]
        %v381 = vld [vmem:[%s260 + $0x28] sm:$0xff]
        %v382 = vadd.f32 %v380, %v381
        %383 = vadd.xlane.f32.xlu0 %v382
        %v384 = vpop.xlane.xlu0 %383
        %v385 = vmul.f32 %v384, %v271
        %v386 = vsub.f32 %v380, %v385
        %v387 = vsub.f32 %v381, %v385
        %v388 = vmul.f32 %v386, %v386
        %v389 = vmul.f32 %v387, %v387
        %v390 = vadd.f32 %v388, %v389
        %391 = vadd.xlane.f32.xlu0 %v390
        %v392 = vpop.xlane.xlu0 %391
        %v393 = vmul.f32 %v392, %v271
        %s394 = scalar_lea.vmem %s1, 8
        %v395 = vld [vmem:[%s394] ss:$2 sm:$0x3]
        %s396 = scalar_lea.vmem %s1, 9
        %v397 = vld [vmem:[%s396] ss:$2 sm:$0x3]
        %v399 = vlaneseq
        %v400 = vshrl.u32 %v399, 7
        %v401 = vsub.s32 0, %v400
        %v402 = vrot.slane %v395, %v401
        %v403 = vlaneseq
        %v404 = vshrl.u32 %v403, 7
        %v405 = vsub.s32 1, %v404
        %v406 = vrot.slane %v395, %v405
        %v409 = vmul.f32 %v402, %v386
        %v410 = vmul.f32 %v406, %v387
        %v411 = vadd.f32 %v393, 1e-05
        %v412 = vrsqrt.pop %v411
        %v413 = vmul.f32 %v409, %v412
        %v414 = vmul.f32 %v410, %v412
        %v416 = vlaneseq
        %v417 = vshrl.u32 %v416, 7
        %v418 = vsub.s32 0, %v417
        %v419 = vrot.slane %v397, %v418
        %v420 = vlaneseq
        %v421 = vshrl.u32 %v420, 7
        %v422 = vsub.s32 1, %v421
        %v423 = vrot.slane %v397, %v422
        %v426 = vadd.f32 %v413, %v419
        %v427 = vadd.f32 %v414, %v423
        %v428 = vpack.c.bf16 %v426, %v426
        %v429 = vpack.c.bf16 %v427, %v427
        %v432 = vunpack.c.l.b16 %v428
        %v433 = vunpack.c.l.b16 %v429
        %v434 = vpack.c.b16 %v433, %v432
        %436 = vst [vmem:[#allocation2 + $0x10] sm:$0xff] %v434
        %v437 = vld [vmem:[%s2] sm:$0xf]
        %v438 = vld [vmem:[%s2 + $0x4] sm:$0x3]
        %v439 = vld [vmem:[%s2 + $0x6] sm:$0x1]
        %v440 = vld [vmem:[%s2 + $0x7] sm:$0x1]
        %v441 = vld [vmem:[%s2 + $0x8] sm:$0x1]
        %v442 = vld [vmem:[%s5] sm:$0xf]
        %v443 = vld [vmem:[%s5 + $0x4] sm:$0xf]
        %v444 = vld [vmem:[%s5 + $0x8] sm:$0xf]
        %v445 = vld [vmem:[%s5 + $0xc] sm:$0xf]
        %v446 = vld [vmem:[%s5 + $0x10] sm:$0xf]
        %v447 = vld [vmem:[%s5 + $0x14] sm:$0xf]
        %v448 = vld [vmem:[%s5 + $0x18] sm:$0xf]
        %v449 = vld [vmem:[%s5 + $0x1c] sm:$0xf]
        %v450 = vld [vmem:[%s5 + $0x20] sm:$0xf]
        %v451 = vld [vmem:[%s5 + $0x24] sm:$0xf]
        %v452 = vld [vmem:[%s5 + $0x28] sm:$0xf]
        %v453 = vld [vmem:[%s5 + $0x2c] sm:$0xf]
        %v454 = vld [vmem:[%s5 + $0x30] sm:$0xf]
        %v455 = vld [vmem:[%s5 + $0x34] sm:$0xf]
        %v456 = vld [vmem:[%s5 + $0x38] sm:$0xf]
        %v457 = vld [vmem:[%s5 + $0x3c] sm:$0xf]
        %v458 = vld [vmem:[%s5 + $0x40] sm:$0xf]
        %v459 = vld [vmem:[%s5 + $0x44] sm:$0xf]
        %v460 = vld [vmem:[%s5 + $0x48] sm:$0xf]
        %v461 = vld [vmem:[%s5 + $0x4c] sm:$0xf]
        %v462 = vld [vmem:[%s5 + $0x50] sm:$0xf]
        %v463 = vld [vmem:[%s5 + $0x54] sm:$0xf]
        %v464 = vld [vmem:[%s5 + $0x58] sm:$0xf]
        %v465 = vld [vmem:[%s5 + $0x5c] sm:$0xf]
        %v466 = vld [vmem:[%s5 + $0x60] sm:$0xf]
        %v467 = vld [vmem:[%s5 + $0x64] sm:$0xf]
        %v468 = vld [vmem:[%s5 + $0x68] sm:$0xf]
        %v469 = vld [vmem:[%s5 + $0x6c] sm:$0xf]
        %v470 = vld [vmem:[%s5 + $0x70] sm:$0xf]
        %v471 = vld [vmem:[%s5 + $0x74] sm:$0xf]
        %v472 = vld [vmem:[%s5 + $0x78] sm:$0xf]
        %v473 = vld [vmem:[%s5 + $0x7c] sm:$0xf]
        %v474 = vld [vmem:[%s5 + $0x80] sm:$0xf]
        %v475 = vld [vmem:[%s5 + $0x84] sm:$0xf]
        %v476 = vld [vmem:[%s5 + $0x88] sm:$0xf]
        %v477 = vld [vmem:[%s5 + $0x8c] sm:$0xf]
        %v478 = vld [vmem:[%s5 + $0x90] sm:$0xf]
        %v479 = vld [vmem:[%s5 + $0x94] sm:$0xf]
        %v480 = vld [vmem:[%s5 + $0x98] sm:$0xf]
        %v481 = vld [vmem:[%s5 + $0x9c] sm:$0xf]
        %v482 = vld [vmem:[%s5 + $0xa0] sm:$0xf]
        %v483 = vld [vmem:[%s5 + $0xa4] sm:$0xf]
        %v484 = vld [vmem:[%s5 + $0xa8] sm:$0xf]
        %v485 = vld [vmem:[%s5 + $0xac] sm:$0xf]
        %v486 = vld [vmem:[%s5 + $0xb0] sm:$0xf]
        %v487 = vld [vmem:[%s5 + $0xb4] sm:$0xf]
        %v488 = vld [vmem:[%s5 + $0xb8] sm:$0xf]
        %v489 = vld [vmem:[%s5 + $0xbc] sm:$0xf]
        %v490 = vld [vmem:[%s5 + $0xc0] sm:$0xf]
        %v491 = vld [vmem:[%s5 + $0xc4] sm:$0xf]
        %v492 = vld [vmem:[%s5 + $0xc8] sm:$0xf]
        %v493 = vld [vmem:[%s5 + $0xcc] sm:$0xf]
        %v494 = vld [vmem:[%s5 + $0xd0] sm:$0xf]
        %v495 = vld [vmem:[%s5 + $0xd4] sm:$0xf]
        %v496 = vld [vmem:[%s5 + $0xd8] sm:$0xf]
        %v497 = vld [vmem:[%s5 + $0xdc] sm:$0xf]
        %v498 = vld [vmem:[%s5 + $0xe0] sm:$0xf]
        %v499 = vld [vmem:[%s5 + $0xe4] sm:$0xf]
        %v500 = vld [vmem:[%s5 + $0xe8] sm:$0xf]
        %v501 = vld [vmem:[%s5 + $0xec] sm:$0xf]
        %v502 = vld [vmem:[%s5 + $0xf0] sm:$0xf]
        %v503 = vld [vmem:[%s5 + $0xf4] sm:$0xf]
        %v504 = vld [vmem:[%s5 + $0xf8] sm:$0xf]
        %v505 = vld [vmem:[%s5 + $0xfc] sm:$0xf]
        %v506 = vld [vmem:[#allocation2] sm:$0xff]
        %v507 = vld [vmem:[#allocation2 + $0x8] sm:$0xff]
        %v508 = vld [vmem:[#allocation2 + $0x10] sm:$0xff]
        %v509 = vld [vmem:[#allocation3] sm:$0xff]
        %v510 = vld [vmem:[#allocation3 + $0x8] sm:$0xff]
        %v511 = vld [vmem:[#allocation3 + $0x10] sm:$0xff]
        %v512 = vld [vmem:[#allocation3 + $0x18] sm:$0xff]
        %v513 = vld [vmem:[#allocation3 + $0x20] sm:$0xff]
        %v514 = vld [vmem:[#allocation3 + $0x28] sm:$0xff]
        %v515 = vld [vmem:[#allocation3 + $0x30] sm:$0xff]
        %v516 = vld [vmem:[#allocation3 + $0x38] sm:$0xff]
        %v517 = vld [vmem:[#allocation3 + $0x40] sm:$0xff]
        %v518 = vld [vmem:[#allocation3 + $0x48] sm:$0xff]
        %v519 = vld [vmem:[#allocation3 + $0x50] sm:$0xff]
        %v520 = vld [vmem:[#allocation3 + $0x58] sm:$0xff]
        %v521 = vld [vmem:[#allocation3 + $0x60] sm:$0xff]
        %v522 = vld [vmem:[#allocation3 + $0x68] sm:$0xff]
        %v523 = vld [vmem:[#allocation3 + $0x70] sm:$0xff]
        %v524 = vld [vmem:[#allocation3 + $0x78] sm:$0xff]
        %v525 = vld [vmem:[#allocation3 + $0x80] sm:$0xff]
        %v526 = vld [vmem:[#allocation3 + $0x88] sm:$0xff]
        %v527 = vld [vmem:[#allocation3 + $0x90] sm:$0xff]
        %v528 = vld [vmem:[#allocation3 + $0x98] sm:$0xff]
        %v529 = vld [vmem:[#allocation3 + $0xa0] sm:$0xff]
        %v530 = vld [vmem:[#allocation3 + $0xa8] sm:$0xff]
        %v531 = vld [vmem:[#allocation3 + $0xb0] sm:$0xff]
        %v532 = vld [vmem:[#allocation3 + $0xb8] sm:$0xff]
        %v533 = vld [vmem:[#allocation3 + $0xc0] sm:$0xff]
        %v534 = vld [vmem:[#allocation3 + $0xc8] sm:$0xff]
        %v535 = vld [vmem:[#allocation3 + $0xd0] sm:$0xff]
        %v536 = vld [vmem:[#allocation3 + $0xd8] sm:$0xff]
        %v537 = vld [vmem:[#allocation3 + $0xe0] sm:$0xff]
        %v538 = vld [vmem:[#allocation3 + $0xe8] sm:$0xff]
        %v539 = vld [vmem:[#allocation3 + $0xf0] sm:$0xff]
        %v540 = vld [vmem:[#allocation3 + $0xf8] sm:$0xff]
        %v541 = vld [vmem:[#allocation3 + $0x100] sm:$0xff]
        %v542 = vld [vmem:[#allocation3 + $0x108] sm:$0xff]
        %v543 = vld [vmem:[#allocation3 + $0x110] sm:$0xff]
        %v544 = vld [vmem:[#allocation3 + $0x118] sm:$0xff]
        %v545 = vld [vmem:[#allocation3 + $0x120] sm:$0xff]
        %v546 = vld [vmem:[#allocation3 + $0x128] sm:$0xff]
        %v547 = vld [vmem:[#allocation3 + $0x130] sm:$0xff]
        %v548 = vld [vmem:[#allocation3 + $0x138] sm:$0xff]
        %v549 = vld [vmem:[#allocation3 + $0x140] sm:$0xff]
        %v550 = vld [vmem:[#allocation3 + $0x148] sm:$0xff]
        %v551 = vld [vmem:[#allocation3 + $0x150] sm:$0xff]
        %v552 = vld [vmem:[#allocation3 + $0x158] sm:$0xff]
        %v553 = vld [vmem:[#allocation3 + $0x160] sm:$0xff]
        %v554 = vld [vmem:[#allocation3 + $0x168] sm:$0xff]
        %v555 = vld [vmem:[#allocation3 + $0x170] sm:$0xff]
        %v556 = vld [vmem:[#allocation3 + $0x178] sm:$0xff]
        %v557 = vld [vmem:[#allocation3 + $0x180] sm:$0xff]
        %v558 = vld [vmem:[#allocation3 + $0x188] sm:$0xff]
        %v559 = vld [vmem:[#allocation3 + $0x190] sm:$0xff]
        %v560 = vld [vmem:[#allocation3 + $0x198] sm:$0xff]
        %v561 = vld [vmem:[#allocation3 + $0x1a0] sm:$0xff]
        %v562 = vld [vmem:[#allocation3 + $0x1a8] sm:$0xff]
        %v563 = vld [vmem:[#allocation3 + $0x1b0] sm:$0xff]
        %v564 = vld [vmem:[#allocation3 + $0x1b8] sm:$0xff]
        %v565 = vld [vmem:[#allocation3 + $0x1c0] sm:$0xff]
        %v566 = vld [vmem:[#allocation3 + $0x1c8] sm:$0xff]
        %v567 = vld [vmem:[#allocation3 + $0x1d0] sm:$0xff]
        %v568 = vld [vmem:[#allocation3 + $0x1d8] sm:$0xff]
        %v569 = vld [vmem:[#allocation3 + $0x1e0] sm:$0xff]
        %v570 = vld [vmem:[#allocation3 + $0x1e8] sm:$0xff]
        %v571 = vld [vmem:[#allocation3 + $0x1f0] sm:$0xff]
        %v572 = vld [vmem:[#allocation3 + $0x1f8] sm:$0xff]
        %v573 = vld [vmem:[#allocation3 + $0x200] sm:$0xff]
        %v574 = vld [vmem:[#allocation3 + $0x208] sm:$0xff]
        %v575 = vld [vmem:[#allocation3 + $0x210] sm:$0xff]
        %v576 = vld [vmem:[#allocation3 + $0x218] sm:$0xff]
        %v577 = vld [vmem:[#allocation3 + $0x220] sm:$0xff]
        %v578 = vld [vmem:[#allocation3 + $0x228] sm:$0xff]
        %v579 = vld [vmem:[#allocation3 + $0x230] sm:$0xff]
        %v580 = vld [vmem:[#allocation3 + $0x238] sm:$0xff]
        %v581 = vld [vmem:[#allocation3 + $0x240] sm:$0xff]
        %v582 = vld [vmem:[#allocation3 + $0x248] sm:$0xff]
        %v583 = vld [vmem:[#allocation3 + $0x250] sm:$0xff]
        %v584 = vld [vmem:[#allocation3 + $0x258] sm:$0xff]
        %v585 = vld [vmem:[#allocation3 + $0x260] sm:$0xff]
        %v586 = vld [vmem:[#allocation3 + $0x268] sm:$0xff]
        %v587 = vld [vmem:[#allocation3 + $0x270] sm:$0xff]
        %v588 = vld [vmem:[#allocation3 + $0x278] sm:$0xff]
        %v589 = vld [vmem:[#allocation3 + $0x280] sm:$0xff]
        %v590 = vld [vmem:[#allocation3 + $0x288] sm:$0xff]
        %v591 = vld [vmem:[#allocation3 + $0x290] sm:$0xff]
        %v592 = vld [vmem:[#allocation3 + $0x298] sm:$0xff]
        %v593 = vld [vmem:[#allocation3 + $0x2a0] sm:$0xff]
        %v594 = vld [vmem:[#allocation3 + $0x2a8] sm:$0xff]
        %v595 = vld [vmem:[#allocation3 + $0x2b0] sm:$0xff]
        %v596 = vld [vmem:[#allocation3 + $0x2b8] sm:$0xff]
        %v597 = vld [vmem:[#allocation3 + $0x2c0] sm:$0xff]
        %v598 = vld [vmem:[#allocation3 + $0x2c8] sm:$0xff]
        %v599 = vld [vmem:[#allocation3 + $0x2d0] sm:$0xff]
        %v600 = vld [vmem:[#allocation3 + $0x2d8] sm:$0xff]
        %v601 = vld [vmem:[#allocation3 + $0x2e0] sm:$0xff]
        %v602 = vld [vmem:[#allocation3 + $0x2e8] sm:$0xff]
        %v603 = vld [vmem:[#allocation3 + $0x2f0] sm:$0xff]
        %v604 = vld [vmem:[#allocation3 + $0x2f8] sm:$0xff]
        %v605 = vld [vmem:[#allocation3 + $0x300] sm:$0xff]
        %v606 = vld [vmem:[#allocation3 + $0x308] sm:$0xff]
        %v607 = vld [vmem:[#allocation3 + $0x310] sm:$0xff]
        %v608 = vld [vmem:[#allocation3 + $0x318] sm:$0xff]
        %v609 = vld [vmem:[#allocation3 + $0x320] sm:$0xff]
        %v610 = vld [vmem:[#allocation3 + $0x328] sm:$0xff]
        %v611 = vld [vmem:[#allocation3 + $0x330] sm:$0xff]
        %v612 = vld [vmem:[#allocation3 + $0x338] sm:$0xff]
        %v613 = vld [vmem:[#allocation3 + $0x340] sm:$0xff]
        %v614 = vld [vmem:[#allocation3 + $0x348] sm:$0xff]
        %v615 = vld [vmem:[#allocation3 + $0x350] sm:$0xff]
        %v616 = vld [vmem:[#allocation3 + $0x358] sm:$0xff]
        %v617 = vld [vmem:[#allocation3 + $0x360] sm:$0xff]
        %v618 = vld [vmem:[#allocation3 + $0x368] sm:$0xff]
        %v619 = vld [vmem:[#allocation3 + $0x370] sm:$0xff]
        %v620 = vld [vmem:[#allocation3 + $0x378] sm:$0xff]
        %v621 = vld [vmem:[#allocation3 + $0x380] sm:$0xff]
        %v622 = vld [vmem:[#allocation3 + $0x388] sm:$0xff]
        %v623 = vld [vmem:[#allocation3 + $0x390] sm:$0xff]
        %v624 = vld [vmem:[#allocation3 + $0x398] sm:$0xff]
        %v625 = vld [vmem:[#allocation3 + $0x3a0] sm:$0xff]
        %v626 = vld [vmem:[#allocation3 + $0x3a8] sm:$0xff]
        %v627 = vld [vmem:[#allocation3 + $0x3b0] sm:$0xff]
        %v628 = vld [vmem:[#allocation3 + $0x3b8] sm:$0xff]
        %v629 = vld [vmem:[#allocation3 + $0x3c0] sm:$0xff]
        %v630 = vld [vmem:[#allocation3 + $0x3c8] sm:$0xff]
        %v631 = vld [vmem:[#allocation3 + $0x3d0] sm:$0xff]
        %v632 = vld [vmem:[#allocation3 + $0x3d8] sm:$0xff]
        %v633 = vld [vmem:[#allocation3 + $0x3e0] sm:$0xff]
        %v634 = vld [vmem:[#allocation3 + $0x3e8] sm:$0xff]
        %v635 = vld [vmem:[#allocation3 + $0x3f0] sm:$0xff]
        %v636 = vld [vmem:[#allocation3 + $0x3f8] sm:$0xff]
        %v637 = vld [vmem:[#allocation3 + $0x400] sm:$0xff]
        %v638 = vld [vmem:[#allocation3 + $0x408] sm:$0xff]
        %v639 = vld [vmem:[#allocation3 + $0x410] sm:$0xff]
        %v640 = vld [vmem:[#allocation3 + $0x418] sm:$0xff]
        %v641 = vld [vmem:[#allocation3 + $0x420] sm:$0xff]
        %v642 = vld [vmem:[#allocation3 + $0x428] sm:$0xff]
        %v643 = vld [vmem:[#allocation3 + $0x430] sm:$0xff]
        %v644 = vld [vmem:[#allocation3 + $0x438] sm:$0xff]
        %v645 = vld [vmem:[#allocation3 + $0x440] sm:$0xff]
        %v646 = vld [vmem:[#allocation3 + $0x448] sm:$0xff]
        %v647 = vld [vmem:[#allocation3 + $0x450] sm:$0xff]
        %v648 = vld [vmem:[#allocation3 + $0x458] sm:$0xff]
        %v649 = vld [vmem:[#allocation3 + $0x460] sm:$0xff]
        %v650 = vld [vmem:[#allocation3 + $0x468] sm:$0xff]
        %v651 = vld [vmem:[#allocation3 + $0x470] sm:$0xff]
        %v652 = vld [vmem:[#allocation3 + $0x478] sm:$0xff]
        %v653 = vld [vmem:[#allocation3 + $0x480] sm:$0xff]
        %v654 = vld [vmem:[#allocation3 + $0x488] sm:$0xff]
        %v655 = vld [vmem:[#allocation3 + $0x490] sm:$0xff]
        %v656 = vld [vmem:[#allocation3 + $0x498] sm:$0xff]
        %v657 = vld [vmem:[#allocation3 + $0x4a0] sm:$0xff]
        %v658 = vld [vmem:[#allocation3 + $0x4a8] sm:$0xff]
        %v659 = vld [vmem:[#allocation3 + $0x4b0] sm:$0xff]
        %v660 = vld [vmem:[#allocation3 + $0x4b8] sm:$0xff]
        %v661 = vld [vmem:[#allocation3 + $0x4c0] sm:$0xff]
        %v662 = vld [vmem:[#allocation3 + $0x4c8] sm:$0xff]
        %v663 = vld [vmem:[#allocation3 + $0x4d0] sm:$0xff]
        %v664 = vld [vmem:[#allocation3 + $0x4d8] sm:$0xff]
        %v665 = vld [vmem:[#allocation3 + $0x4e0] sm:$0xff]
        %v666 = vld [vmem:[#allocation3 + $0x4e8] sm:$0xff]
        %v667 = vld [vmem:[#allocation3 + $0x4f0] sm:$0xff]
        %v668 = vld [vmem:[#allocation3 + $0x4f8] sm:$0xff]
        %v669 = vld [vmem:[#allocation3 + $0x500] sm:$0xff]
        %v670 = vld [vmem:[#allocation3 + $0x508] sm:$0xff]
        %v671 = vld [vmem:[#allocation3 + $0x510] sm:$0xff]
        %v672 = vld [vmem:[#allocation3 + $0x518] sm:$0xff]
        %v673 = vld [vmem:[#allocation3 + $0x520] sm:$0xff]
        %v674 = vld [vmem:[#allocation3 + $0x528] sm:$0xff]
        %v675 = vld [vmem:[#allocation3 + $0x530] sm:$0xff]
        %v676 = vld [vmem:[#allocation3 + $0x538] sm:$0xff]
        %v677 = vld [vmem:[#allocation3 + $0x540] sm:$0xff]
        %v678 = vld [vmem:[#allocation3 + $0x548] sm:$0xff]
        %v679 = vld [vmem:[#allocation3 + $0x550] sm:$0xff]
        %v680 = vld [vmem:[#allocation3 + $0x558] sm:$0xff]
        %v681 = vld [vmem:[#allocation3 + $0x560] sm:$0xff]
        %v682 = vld [vmem:[#allocation3 + $0x568] sm:$0xff]
        %v683 = vld [vmem:[#allocation3 + $0x570] sm:$0xff]
        %v684 = vld [vmem:[#allocation3 + $0x578] sm:$0xff]
        %v685 = vld [vmem:[#allocation3 + $0x580] sm:$0xff]
        %v686 = vld [vmem:[#allocation3 + $0x588] sm:$0xff]
        %v687 = vld [vmem:[#allocation3 + $0x590] sm:$0xff]
        %v688 = vld [vmem:[#allocation3 + $0x598] sm:$0xff]
        %v689 = vld [vmem:[#allocation3 + $0x5a0] sm:$0xff]
        %v690 = vld [vmem:[#allocation3 + $0x5a8] sm:$0xff]
        %v691 = vld [vmem:[#allocation3 + $0x5b0] sm:$0xff]
        %v692 = vld [vmem:[#allocation3 + $0x5b8] sm:$0xff]
        %v693 = vld [vmem:[#allocation3 + $0x5c0] sm:$0xff]
        %v694 = vld [vmem:[#allocation3 + $0x5c8] sm:$0xff]
        %v695 = vld [vmem:[#allocation3 + $0x5d0] sm:$0xff]
        %v696 = vld [vmem:[#allocation3 + $0x5d8] sm:$0xff]
        %v697 = vld [vmem:[#allocation3 + $0x5e0] sm:$0xff]
        %v698 = vld [vmem:[#allocation3 + $0x5e8] sm:$0xff]
        %v699 = vld [vmem:[#allocation3 + $0x5f0] sm:$0xff]
        %v700 = vld [vmem:[#allocation3 + $0x5f8] sm:$0xff]
        %v702 = vlaneseq
        %v703 = vshrl.u32 %v702, 7
        %v704 = vsub.s32 0, %v703
        %v705 = vrot.slane %v437, %v704
        %v706 = vlaneseq
        %v707 = vshrl.u32 %v706, 7
        %v708 = vsub.s32 1, %v707
        %v709 = vrot.slane %v437, %v708
        %v710 = vlaneseq
        %v711 = vshrl.u32 %v710, 7
        %v712 = vsub.s32 2, %v711
        %v713 = vrot.slane %v437, %v712
        %v714 = vlaneseq
        %v715 = vshrl.u32 %v714, 7
        %v716 = vsub.s32 3, %v715
        %v717 = vrot.slane %v437, %v716
        %v725 = vunpack.c.l.b16 %v506
        %v726 = vunpack.c.h.b16 %v506
        %v727 = vunpack.c.l.b16 %v507
        %v728 = vunpack.c.h.b16 %v507
        %v729 = vunpack.c.l.b16 %v508
        %v730 = vunpack.c.h.b16 %v508
        %v731 = vpack.c.b16 %v725, %v725
        %v732 = vpack.c.b16 %v726, %v726
        %v733 = vpack.c.b16 %v727, %v727
        %v734 = vpack.c.b16 %v728, %v728
        %v735 = vpack.c.b16 %v729, %v729
        %v736 = vpack.c.b16 %v730, %v730
        %v935 = vunpack.c.l.b16 %v509
        %v936 = vunpack.c.h.b16 %v509
        %v937 = vunpack.c.l.b16 %v510
        %v938 = vunpack.c.h.b16 %v510
        %v939 = vunpack.c.l.b16 %v511
        %v940 = vunpack.c.h.b16 %v511
        %v941 = vunpack.c.l.b16 %v512
        %v942 = vunpack.c.h.b16 %v512
        %v943 = vunpack.c.l.b16 %v513
        %v944 = vunpack.c.h.b16 %v513
        %v945 = vunpack.c.l.b16 %v514
        %v946 = vunpack.c.h.b16 %v514
        %v947 = vunpack.c.l.b16 %v515
        %v948 = vunpack.c.h.b16 %v515
        %v949 = vunpack.c.l.b16 %v516
        %v950 = vunpack.c.h.b16 %v516
        %v951 = vunpack.c.l.b16 %v517
        %v952 = vunpack.c.h.b16 %v517
        %v953 = vunpack.c.l.b16 %v518
        %v954 = vunpack.c.h.b16 %v518
        %v955 = vunpack.c.l.b16 %v519
        %v956 = vunpack.c.h.b16 %v519
        %v957 = vunpack.c.l.b16 %v520
        %v958 = vunpack.c.h.b16 %v520
        %v959 = vunpack.c.l.b16 %v521
        %v960 = vunpack.c.h.b16 %v521
        %v961 = vunpack.c.l.b16 %v522
        %v962 = vunpack.c.h.b16 %v522
        %v963 = vunpack.c.l.b16 %v523
        %v964 = vunpack.c.h.b16 %v523
        %v965 = vunpack.c.l.b16 %v524
        %v966 = vunpack.c.h.b16 %v524
        %v967 = vunpack.c.l.b16 %v525
        %v968 = vunpack.c.h.b16 %v525
        %v969 = vunpack.c.l.b16 %v526
        %v970 = vunpack.c.h.b16 %v526
        %v971 = vunpack.c.l.b16 %v527
        %v972 = vunpack.c.h.b16 %v527
        %v973 = vunpack.c.l.b16 %v528
        %v974 = vunpack.c.h.b16 %v528
        %v975 = vunpack.c.l.b16 %v529
        %v976 = vunpack.c.h.b16 %v529
        %v977 = vunpack.c.l.b16 %v530
        %v978 = vunpack.c.h.b16 %v530
        %v979 = vunpack.c.l.b16 %v531
        %v980 = vunpack.c.h.b16 %v531
        %v981 = vunpack.c.l.b16 %v532
        %v982 = vunpack.c.h.b16 %v532
        %v983 = vunpack.c.l.b16 %v533
        %v984 = vunpack.c.h.b16 %v533
        %v985 = vunpack.c.l.b16 %v534
        %v986 = vunpack.c.h.b16 %v534
        %v987 = vunpack.c.l.b16 %v535
        %v988 = vunpack.c.h.b16 %v535
        %v989 = vunpack.c.l.b16 %v536
        %v990 = vunpack.c.h.b16 %v536
        %v991 = vunpack.c.l.b16 %v537
        %v992 = vunpack.c.h.b16 %v537
        %v993 = vunpack.c.l.b16 %v538
        %v994 = vunpack.c.h.b16 %v538
        %v995 = vunpack.c.l.b16 %v539
        %v996 = vunpack.c.h.b16 %v539
        %v997 = vunpack.c.l.b16 %v540
        %v998 = vunpack.c.h.b16 %v540
        %v999 = vunpack.c.l.b16 %v541
        %v1000 = vunpack.c.h.b16 %v541
        %v1001 = vunpack.c.l.b16 %v542
        %v1002 = vunpack.c.h.b16 %v542
        %v1003 = vunpack.c.l.b16 %v543
        %v1004 = vunpack.c.h.b16 %v543
        %v1005 = vunpack.c.l.b16 %v544
        %v1006 = vunpack.c.h.b16 %v544
        %v1007 = vunpack.c.l.b16 %v545
        %v1008 = vunpack.c.h.b16 %v545
        %v1009 = vunpack.c.l.b16 %v546
        %v1010 = vunpack.c.h.b16 %v546
        %v1011 = vunpack.c.l.b16 %v547
        %v1012 = vunpack.c.h.b16 %v547
        %v1013 = vunpack.c.l.b16 %v548
        %v1014 = vunpack.c.h.b16 %v548
        %v1015 = vunpack.c.l.b16 %v549
        %v1016 = vunpack.c.h.b16 %v549
        %v1017 = vunpack.c.l.b16 %v550
        %v1018 = vunpack.c.h.b16 %v550
        %v1019 = vunpack.c.l.b16 %v551
        %v1020 = vunpack.c.h.b16 %v551
        %v1021 = vunpack.c.l.b16 %v552
        %v1022 = vunpack.c.h.b16 %v552
        %v1023 = vunpack.c.l.b16 %v553
        %v1024 = vunpack.c.h.b16 %v553
        %v1025 = vunpack.c.l.b16 %v554
        %v1026 = vunpack.c.h.b16 %v554
        %v1027 = vunpack.c.l.b16 %v555
        %v1028 = vunpack.c.h.b16 %v555
        %v1029 = vunpack.c.l.b16 %v556
        %v1030 = vunpack.c.h.b16 %v556
        %v1031 = vunpack.c.l.b16 %v557
        %v1032 = vunpack.c.h.b16 %v557
        %v1033 = vunpack.c.l.b16 %v558
        %v1034 = vunpack.c.h.b16 %v558
        %v1035 = vunpack.c.l.b16 %v559
        %v1036 = vunpack.c.h.b16 %v559
        %v1037 = vunpack.c.l.b16 %v560
        %v1038 = vunpack.c.h.b16 %v560
        %v1039 = vunpack.c.l.b16 %v561
        %v1040 = vunpack.c.h.b16 %v561
        %v1041 = vunpack.c.l.b16 %v562
        %v1042 = vunpack.c.h.b16 %v562
        %v1043 = vunpack.c.l.b16 %v563
        %v1044 = vunpack.c.h.b16 %v563
        %v1045 = vunpack.c.l.b16 %v564
        %v1046 = vunpack.c.h.b16 %v564
        %v1047 = vunpack.c.l.b16 %v565
        %v1048 = vunpack.c.h.b16 %v565
        %v1049 = vunpack.c.l.b16 %v566
        %v1050 = vunpack.c.h.b16 %v566
        %v1051 = vunpack.c.l.b16 %v567
        %v1052 = vunpack.c.h.b16 %v567
        %v1053 = vunpack.c.l.b16 %v568
        %v1054 = vunpack.c.h.b16 %v568
        %v1055 = vunpack.c.l.b16 %v569
        %v1056 = vunpack.c.h.b16 %v569
        %v1057 = vunpack.c.l.b16 %v570
        %v1058 = vunpack.c.h.b16 %v570
        %v1059 = vunpack.c.l.b16 %v571
        %v1060 = vunpack.c.h.b16 %v571
        %v1061 = vunpack.c.l.b16 %v572
        %v1062 = vunpack.c.h.b16 %v572
        %v1063 = vunpack.c.l.b16 %v573
        %v1064 = vunpack.c.h.b16 %v573
        %v1065 = vunpack.c.l.b16 %v574
        %v1066 = vunpack.c.h.b16 %v574
        %v1067 = vunpack.c.l.b16 %v575
        %v1068 = vunpack.c.h.b16 %v575
        %v1069 = vunpack.c.l.b16 %v576
        %v1070 = vunpack.c.h.b16 %v576
        %v1071 = vunpack.c.l.b16 %v577
        %v1072 = vunpack.c.h.b16 %v577
        %v1073 = vunpack.c.l.b16 %v578
        %v1074 = vunpack.c.h.b16 %v578
        %v1075 = vunpack.c.l.b16 %v579
        %v1076 = vunpack.c.h.b16 %v579
        %v1077 = vunpack.c.l.b16 %v580
        %v1078 = vunpack.c.h.b16 %v580
        %v1079 = vunpack.c.l.b16 %v581
        %v1080 = vunpack.c.h.b16 %v581
        %v1081 = vunpack.c.l.b16 %v582
        %v1082 = vunpack.c.h.b16 %v582
        %v1083 = vunpack.c.l.b16 %v583
        %v1084 = vunpack.c.h.b16 %v583
        %v1085 = vunpack.c.l.b16 %v584
        %v1086 = vunpack.c.h.b16 %v584
        %v1087 = vunpack.c.l.b16 %v585
        %v1088 = vunpack.c.h.b16 %v585
        %v1089 = vunpack.c.l.b16 %v586
        %v1090 = vunpack.c.h.b16 %v586
        %v1091 = vunpack.c.l.b16 %v587
        %v1092 = vunpack.c.h.b16 %v587
        %v1093 = vunpack.c.l.b16 %v588
        %v1094 = vunpack.c.h.b16 %v588
        %v1095 = vunpack.c.l.b16 %v589
        %v1096 = vunpack.c.h.b16 %v589
        %v1097 = vunpack.c.l.b16 %v590
        %v1098 = vunpack.c.h.b16 %v590
        %v1099 = vunpack.c.l.b16 %v591
        %v1100 = vunpack.c.h.b16 %v591
        %v1101 = vunpack.c.l.b16 %v592
        %v1102 = vunpack.c.h.b16 %v592
        %v1103 = vunpack.c.l.b16 %v593
        %v1104 = vunpack.c.h.b16 %v593
        %v1105 = vunpack.c.l.b16 %v594
        %v1106 = vunpack.c.h.b16 %v594
        %v1107 = vunpack.c.l.b16 %v595
        %v1108 = vunpack.c.h.b16 %v595
        %v1109 = vunpack.c.l.b16 %v596
        %v1110 = vunpack.c.h.b16 %v596
        %v1111 = vunpack.c.l.b16 %v597
        %v1112 = vunpack.c.h.b16 %v597
        %v1113 = vunpack.c.l.b16 %v598
        %v1114 = vunpack.c.h.b16 %v598
        %v1115 = vunpack.c.l.b16 %v599
        %v1116 = vunpack.c.h.b16 %v599
        %v1117 = vunpack.c.l.b16 %v600
        %v1118 = vunpack.c.h.b16 %v600
        %v1119 = vunpack.c.l.b16 %v601
        %v1120 = vunpack.c.h.b16 %v601
        %v1121 = vunpack.c.l.b16 %v602
        %v1122 = vunpack.c.h.b16 %v602
        %v1123 = vunpack.c.l.b16 %v603
        %v1124 = vunpack.c.h.b16 %v603
        %v1125 = vunpack.c.l.b16 %v604
        %v1126 = vunpack.c.h.b16 %v604
        %v1127 = vunpack.c.l.b16 %v605
        %v1128 = vunpack.c.h.b16 %v605
        %v1129 = vunpack.c.l.b16 %v606
        %v1130 = vunpack.c.h.b16 %v606
        %v1131 = vunpack.c.l.b16 %v607
        %v1132 = vunpack.c.h.b16 %v607
        %v1133 = vunpack.c.l.b16 %v608
        %v1134 = vunpack.c.h.b16 %v608
        %v1135 = vunpack.c.l.b16 %v609
        %v1136 = vunpack.c.h.b16 %v609
        %v1137 = vunpack.c.l.b16 %v610
        %v1138 = vunpack.c.h.b16 %v610
        %v1139 = vunpack.c.l.b16 %v611
        %v1140 = vunpack.c.h.b16 %v611
        %v1141 = vunpack.c.l.b16 %v612
        %v1142 = vunpack.c.h.b16 %v612
        %v1143 = vunpack.c.l.b16 %v613
        %v1144 = vunpack.c.h.b16 %v613
        %v1145 = vunpack.c.l.b16 %v614
        %v1146 = vunpack.c.h.b16 %v614
        %v1147 = vunpack.c.l.b16 %v615
        %v1148 = vunpack.c.h.b16 %v615
        %v1149 = vunpack.c.l.b16 %v616
        %v1150 = vunpack.c.h.b16 %v616
        %v1151 = vunpack.c.l.b16 %v617
        %v1152 = vunpack.c.h.b16 %v617
        %v1153 = vunpack.c.l.b16 %v618
        %v1154 = vunpack.c.h.b16 %v618
        %v1155 = vunpack.c.l.b16 %v619
        %v1156 = vunpack.c.h.b16 %v619
        %v1157 = vunpack.c.l.b16 %v620
        %v1158 = vunpack.c.h.b16 %v620
        %v1159 = vunpack.c.l.b16 %v621
        %v1160 = vunpack.c.h.b16 %v621
        %v1161 = vunpack.c.l.b16 %v622
        %v1162 = vunpack.c.h.b16 %v622
        %v1163 = vunpack.c.l.b16 %v623
        %v1164 = vunpack.c.h.b16 %v623
        %v1165 = vunpack.c.l.b16 %v624
        %v1166 = vunpack.c.h.b16 %v624
        %v1167 = vunpack.c.l.b16 %v625
        %v1168 = vunpack.c.h.b16 %v625
        %v1169 = vunpack.c.l.b16 %v626
        %v1170 = vunpack.c.h.b16 %v626
        %v1171 = vunpack.c.l.b16 %v627
        %v1172 = vunpack.c.h.b16 %v627
        %v1173 = vunpack.c.l.b16 %v628
        %v1174 = vunpack.c.h.b16 %v628
        %v1175 = vunpack.c.l.b16 %v629
        %v1176 = vunpack.c.h.b16 %v629
        %v1177 = vunpack.c.l.b16 %v630
        %v1178 = vunpack.c.h.b16 %v630
        %v1179 = vunpack.c.l.b16 %v631
        %v1180 = vunpack.c.h.b16 %v631
        %v1181 = vunpack.c.l.b16 %v632
        %v1182 = vunpack.c.h.b16 %v632
        %v1183 = vunpack.c.l.b16 %v633
        %v1184 = vunpack.c.h.b16 %v633
        %v1185 = vunpack.c.l.b16 %v634
        %v1186 = vunpack.c.h.b16 %v634
        %v1187 = vunpack.c.l.b16 %v635
        %v1188 = vunpack.c.h.b16 %v635
        %v1189 = vunpack.c.l.b16 %v636
        %v1190 = vunpack.c.h.b16 %v636
        %v1191 = vunpack.c.l.b16 %v637
        %v1192 = vunpack.c.h.b16 %v637
        %v1193 = vunpack.c.l.b16 %v638
        %v1194 = vunpack.c.h.b16 %v638
        %v1195 = vunpack.c.l.b16 %v639
        %v1196 = vunpack.c.h.b16 %v639
        %v1197 = vunpack.c.l.b16 %v640
        %v1198 = vunpack.c.h.b16 %v640
        %v1199 = vunpack.c.l.b16 %v641
        %v1200 = vunpack.c.h.b16 %v641
        %v1201 = vunpack.c.l.b16 %v642
        %v1202 = vunpack.c.h.b16 %v642
        %v1203 = vunpack.c.l.b16 %v643
        %v1204 = vunpack.c.h.b16 %v643
        %v1205 = vunpack.c.l.b16 %v644
        %v1206 = vunpack.c.h.b16 %v644
        %v1207 = vunpack.c.l.b16 %v645
        %v1208 = vunpack.c.h.b16 %v645
        %v1209 = vunpack.c.l.b16 %v646
        %v1210 = vunpack.c.h.b16 %v646
        %v1211 = vunpack.c.l.b16 %v647
        %v1212 = vunpack.c.h.b16 %v647
        %v1213 = vunpack.c.l.b16 %v648
        %v1214 = vunpack.c.h.b16 %v648
        %v1215 = vunpack.c.l.b16 %v649
        %v1216 = vunpack.c.h.b16 %v649
        %v1217 = vunpack.c.l.b16 %v650
        %v1218 = vunpack.c.h.b16 %v650
        %v1219 = vunpack.c.l.b16 %v651
        %v1220 = vunpack.c.h.b16 %v651
        %v1221 = vunpack.c.l.b16 %v652
        %v1222 = vunpack.c.h.b16 %v652
        %v1223 = vunpack.c.l.b16 %v653
        %v1224 = vunpack.c.h.b16 %v653
        %v1225 = vunpack.c.l.b16 %v654
        %v1226 = vunpack.c.h.b16 %v654
        %v1227 = vunpack.c.l.b16 %v655
        %v1228 = vunpack.c.h.b16 %v655
        %v1229 = vunpack.c.l.b16 %v656
        %v1230 = vunpack.c.h.b16 %v656
        %v1231 = vunpack.c.l.b16 %v657
        %v1232 = vunpack.c.h.b16 %v657
        %v1233 = vunpack.c.l.b16 %v658
        %v1234 = vunpack.c.h.b16 %v658
        %v1235 = vunpack.c.l.b16 %v659
        %v1236 = vunpack.c.h.b16 %v659
        %v1237 = vunpack.c.l.b16 %v660
        %v1238 = vunpack.c.h.b16 %v660
        %v1239 = vunpack.c.l.b16 %v661
        %v1240 = vunpack.c.h.b16 %v661
        %v1241 = vunpack.c.l.b16 %v662
        %v1242 = vunpack.c.h.b16 %v662
        %v1243 = vunpack.c.l.b16 %v663
        %v1244 = vunpack.c.h.b16 %v663
        %v1245 = vunpack.c.l.b16 %v664
        %v1246 = vunpack.c.h.b16 %v664
        %v1247 = vunpack.c.l.b16 %v665
        %v1248 = vunpack.c.h.b16 %v665
        %v1249 = vunpack.c.l.b16 %v666
        %v1250 = vunpack.c.h.b16 %v666
        %v1251 = vunpack.c.l.b16 %v667
        %v1252 = vunpack.c.h.b16 %v667
        %v1253 = vunpack.c.l.b16 %v668
        %v1254 = vunpack.c.h.b16 %v668
        %v1255 = vunpack.c.l.b16 %v669
        %v1256 = vunpack.c.h.b16 %v669
        %v1257 = vunpack.c.l.b16 %v670
        %v1258 = vunpack.c.h.b16 %v670
        %v1259 = vunpack.c.l.b16 %v671
        %v1260 = vunpack.c.h.b16 %v671
        %v1261 = vunpack.c.l.b16 %v672
        %v1262 = vunpack.c.h.b16 %v672
        %v1263 = vunpack.c.l.b16 %v673
        %v1264 = vunpack.c.h.b16 %v673
        %v1265 = vunpack.c.l.b16 %v674
        %v1266 = vunpack.c.h.b16 %v674
        %v1267 = vunpack.c.l.b16 %v675
        %v1268 = vunpack.c.h.b16 %v675
        %v1269 = vunpack.c.l.b16 %v676
        %v1270 = vunpack.c.h.b16 %v676
        %v1271 = vunpack.c.l.b16 %v677
        %v1272 = vunpack.c.h.b16 %v677
        %v1273 = vunpack.c.l.b16 %v678
        %v1274 = vunpack.c.h.b16 %v678
        %v1275 = vunpack.c.l.b16 %v679
        %v1276 = vunpack.c.h.b16 %v679
        %v1277 = vunpack.c.l.b16 %v680
        %v1278 = vunpack.c.h.b16 %v680
        %v1279 = vunpack.c.l.b16 %v681
        %v1280 = vunpack.c.h.b16 %v681
        %v1281 = vunpack.c.l.b16 %v682
        %v1282 = vunpack.c.h.b16 %v682
        %v1283 = vunpack.c.l.b16 %v683
        %v1284 = vunpack.c.h.b16 %v683
        %v1285 = vunpack.c.l.b16 %v684
        %v1286 = vunpack.c.h.b16 %v684
        %v1287 = vunpack.c.l.b16 %v685
        %v1288 = vunpack.c.h.b16 %v685
        %v1289 = vunpack.c.l.b16 %v686
        %v1290 = vunpack.c.h.b16 %v686
        %v1291 = vunpack.c.l.b16 %v687
        %v1292 = vunpack.c.h.b16 %v687
        %v1293 = vunpack.c.l.b16 %v688
        %v1294 = vunpack.c.h.b16 %v688
        %v1295 = vunpack.c.l.b16 %v689
        %v1296 = vunpack.c.h.b16 %v689
        %v1297 = vunpack.c.l.b16 %v690
        %v1298 = vunpack.c.h.b16 %v690
        %v1299 = vunpack.c.l.b16 %v691
        %v1300 = vunpack.c.h.b16 %v691
        %v1301 = vunpack.c.l.b16 %v692
        %v1302 = vunpack.c.h.b16 %v692
        %v1303 = vunpack.c.l.b16 %v693
        %v1304 = vunpack.c.h.b16 %v693
        %v1305 = vunpack.c.l.b16 %v694
        %v1306 = vunpack.c.h.b16 %v694
        %v1307 = vunpack.c.l.b16 %v695
        %v1308 = vunpack.c.h.b16 %v695
        %v1309 = vunpack.c.l.b16 %v696
        %v1310 = vunpack.c.h.b16 %v696
        %v1311 = vunpack.c.l.b16 %v697
        %v1312 = vunpack.c.h.b16 %v697
        %v1313 = vunpack.c.l.b16 %v698
        %v1314 = vunpack.c.h.b16 %v698
        %v1315 = vunpack.c.l.b16 %v699
        %v1316 = vunpack.c.h.b16 %v699
        %v1317 = vunpack.c.l.b16 %v700
        %v1318 = vunpack.c.h.b16 %v700
        %v1319 = vpack.c.b16 %v939, %v935
        %v1320 = vpack.c.b16 %v940, %v936
        %v1321 = vpack.c.b16 %v941, %v937
        %v1322 = vpack.c.b16 %v942, %v938
        %v1323 = vpack.c.b16 %v947, %v943
        %v1324 = vpack.c.b16 %v948, %v944
        %v1325 = vpack.c.b16 %v949, %v945
        %v1326 = vpack.c.b16 %v950, %v946
        %v1327 = vpack.c.b16 %v955, %v951
        %v1328 = vpack.c.b16 %v956, %v952
        %v1329 = vpack.c.b16 %v957, %v953
        %v1330 = vpack.c.b16 %v958, %v954
        %v1331 = vpack.c.b16 %v963, %v959
        %v1332 = vpack.c.b16 %v964, %v960
        %v1333 = vpack.c.b16 %v965, %v961
        %v1334 = vpack.c.b16 %v966, %v962
        %v1335 = vpack.c.b16 %v971, %v967
        %v1336 = vpack.c.b16 %v972, %v968
        %v1337 = vpack.c.b16 %v973, %v969
        %v1338 = vpack.c.b16 %v974, %v970
        %v1339 = vpack.c.b16 %v979, %v975
        %v1340 = vpack.c.b16 %v980, %v976
        %v1341 = vpack.c.b16 %v981, %v977
        %v1342 = vpack.c.b16 %v982, %v978
        %v1343 = vpack.c.b16 %v987, %v983
        %v1344 = vpack.c.b16 %v988, %v984
        %v1345 = vpack.c.b16 %v989, %v985
        %v1346 = vpack.c.b16 %v990, %v986
        %v1347 = vpack.c.b16 %v995, %v991
        %v1348 = vpack.c.b16 %v996, %v992
        %v1349 = vpack.c.b16 %v997, %v993
        %v1350 = vpack.c.b16 %v998, %v994
        %v1351 = vpack.c.b16 %v1003, %v999
        %v1352 = vpack.c.b16 %v1004, %v1000
        %v1353 = vpack.c.b16 %v1005, %v1001
        %v1354 = vpack.c.b16 %v1006, %v1002
        %v1355 = vpack.c.b16 %v1011, %v1007
        %v1356 = vpack.c.b16 %v1012, %v1008
        %v1357 = vpack.c.b16 %v1013, %v1009
        %v1358 = vpack.c.b16 %v1014, %v1010
        %v1359 = vpack.c.b16 %v1019, %v1015
        %v1360 = vpack.c.b16 %v1020, %v1016
        %v1361 = vpack.c.b16 %v1021, %v1017
        %v1362 = vpack.c.b16 %v1022, %v1018
        %v1363 = vpack.c.b16 %v1027, %v1023
        %v1364 = vpack.c.b16 %v1028, %v1024
        %v1365 = vpack.c.b16 %v1029, %v1025
        %v1366 = vpack.c.b16 %v1030, %v1026
        %v1367 = vpack.c.b16 %v1035, %v1031
        %v1368 = vpack.c.b16 %v1036, %v1032
        %v1369 = vpack.c.b16 %v1037, %v1033
        %v1370 = vpack.c.b16 %v1038, %v1034
        %v1371 = vpack.c.b16 %v1043, %v1039
        %v1372 = vpack.c.b16 %v1044, %v1040
        %v1373 = vpack.c.b16 %v1045, %v1041
        %v1374 = vpack.c.b16 %v1046, %v1042
        %v1375 = vpack.c.b16 %v1051, %v1047
        %v1376 = vpack.c.b16 %v1052, %v1048
        %v1377 = vpack.c.b16 %v1053, %v1049
        %v1378 = vpack.c.b16 %v1054, %v1050
        %v1379 = vpack.c.b16 %v1059, %v1055
        %v1380 = vpack.c.b16 %v1060, %v1056
        %v1381 = vpack.c.b16 %v1061, %v1057
        %v1382 = vpack.c.b16 %v1062, %v1058
        %v1383 = vpack.c.b16 %v1067, %v1063
        %v1384 = vpack.c.b16 %v1068, %v1064
        %v1385 = vpack.c.b16 %v1069, %v1065
        %v1386 = vpack.c.b16 %v1070, %v1066
        %v1387 = vpack.c.b16 %v1075, %v1071
        %v1388 = vpack.c.b16 %v1076, %v1072
        %v1389 = vpack.c.b16 %v1077, %v1073
        %v1390 = vpack.c.b16 %v1078, %v1074
        %v1391 = vpack.c.b16 %v1083, %v1079
        %v1392 = vpack.c.b16 %v1084, %v1080
        %v1393 = vpack.c.b16 %v1085, %v1081
        %v1394 = vpack.c.b16 %v1086, %v1082
        %v1395 = vpack.c.b16 %v1091, %v1087
        %v1396 = vpack.c.b16 %v1092, %v1088
        %v1397 = vpack.c.b16 %v1093, %v1089
        %v1398 = vpack.c.b16 %v1094, %v1090
        %v1399 = vpack.c.b16 %v1099, %v1095
        %v1400 = vpack.c.b16 %v1100, %v1096
        %v1401 = vpack.c.b16 %v1101, %v1097
        %v1402 = vpack.c.b16 %v1102, %v1098
        %v1403 = vpack.c.b16 %v1107, %v1103
        %v1404 = vpack.c.b16 %v1108, %v1104
        %v1405 = vpack.c.b16 %v1109, %v1105
        %v1406 = vpack.c.b16 %v1110, %v1106
        %v1407 = vpack.c.b16 %v1115, %v1111
        %v1408 = vpack.c.b16 %v1116, %v1112
        %v1409 = vpack.c.b16 %v1117, %v1113
        %v1410 = vpack.c.b16 %v1118, %v1114
        %v1411 = vpack.c.b16 %v1123, %v1119
        %v1412 = vpack.c.b16 %v1124, %v1120
        %v1413 = vpack.c.b16 %v1125, %v1121
        %v1414 = vpack.c.b16 %v1126, %v1122
        %v1415 = vpack.c.b16 %v1131, %v1127
        %v1416 = vpack.c.b16 %v1132, %v1128
        %v1417 = vpack.c.b16 %v1133, %v1129
        %v1418 = vpack.c.b16 %v1134, %v1130
        %v1419 = vpack.c.b16 %v1139, %v1135
        %v1420 = vpack.c.b16 %v1140, %v1136
        %v1421 = vpack.c.b16 %v1141, %v1137
        %v1422 = vpack.c.b16 %v1142, %v1138
        %v1423 = vpack.c.b16 %v1147, %v1143
        %v1424 = vpack.c.b16 %v1148, %v1144
        %v1425 = vpack.c.b16 %v1149, %v1145
        %v1426 = vpack.c.b16 %v1150, %v1146
        %v1427 = vpack.c.b16 %v1155, %v1151
        %v1428 = vpack.c.b16 %v1156, %v1152
        %v1429 = vpack.c.b16 %v1157, %v1153
        %v1430 = vpack.c.b16 %v1158, %v1154
        %v1431 = vpack.c.b16 %v1163, %v1159
        %v1432 = vpack.c.b16 %v1164, %v1160
        %v1433 = vpack.c.b16 %v1165, %v1161
        %v1434 = vpack.c.b16 %v1166, %v1162
        %v1435 = vpack.c.b16 %v1171, %v1167
        %v1436 = vpack.c.b16 %v1172, %v1168
        %v1437 = vpack.c.b16 %v1173, %v1169
        %v1438 = vpack.c.b16 %v1174, %v1170
        %v1439 = vpack.c.b16 %v1179, %v1175
        %v1440 = vpack.c.b16 %v1180, %v1176
        %v1441 = vpack.c.b16 %v1181, %v1177
        %v1442 = vpack.c.b16 %v1182, %v1178
        %v1443 = vpack.c.b16 %v1187, %v1183
        %v1444 = vpack.c.b16 %v1188, %v1184
        %v1445 = vpack.c.b16 %v1189, %v1185
        %v1446 = vpack.c.b16 %v1190, %v1186
        %v1447 = vpack.c.b16 %v1195, %v1191
        %v1448 = vpack.c.b16 %v1196, %v1192
        %v1449 = vpack.c.b16 %v1197, %v1193
        %v1450 = vpack.c.b16 %v1198, %v1194
        %v1451 = vpack.c.b16 %v1203, %v1199
        %v1452 = vpack.c.b16 %v1204, %v1200
        %v1453 = vpack.c.b16 %v1205, %v1201
        %v1454 = vpack.c.b16 %v1206, %v1202
        %v1455 = vpack.c.b16 %v1211, %v1207
        %v1456 = vpack.c.b16 %v1212, %v1208
        %v1457 = vpack.c.b16 %v1213, %v1209
        %v1458 = vpack.c.b16 %v1214, %v1210
        %v1459 = vpack.c.b16 %v1219, %v1215
        %v1460 = vpack.c.b16 %v1220, %v1216
        %v1461 = vpack.c.b16 %v1221, %v1217
        %v1462 = vpack.c.b16 %v1222, %v1218
        %v1463 = vpack.c.b16 %v1227, %v1223
        %v1464 = vpack.c.b16 %v1228, %v1224
        %v1465 = vpack.c.b16 %v1229, %v1225
        %v1466 = vpack.c.b16 %v1230, %v1226
        %v1467 = vpack.c.b16 %v1235, %v1231
        %v1468 = vpack.c.b16 %v1236, %v1232
        %v1469 = vpack.c.b16 %v1237, %v1233
        %v1470 = vpack.c.b16 %v1238, %v1234
        %v1471 = vpack.c.b16 %v1243, %v1239
        %v1472 = vpack.c.b16 %v1244, %v1240
        %v1473 = vpack.c.b16 %v1245, %v1241
        %v1474 = vpack.c.b16 %v1246, %v1242
        %v1475 = vpack.c.b16 %v1251, %v1247
        %v1476 = vpack.c.b16 %v1252, %v1248
        %v1477 = vpack.c.b16 %v1253, %v1249
        %v1478 = vpack.c.b16 %v1254, %v1250
        %v1479 = vpack.c.b16 %v1259, %v1255
        %v1480 = vpack.c.b16 %v1260, %v1256
        %v1481 = vpack.c.b16 %v1261, %v1257
        %v1482 = vpack.c.b16 %v1262, %v1258
        %v1483 = vpack.c.b16 %v1267, %v1263
        %v1484 = vpack.c.b16 %v1268, %v1264
        %v1485 = vpack.c.b16 %v1269, %v1265
        %v1486 = vpack.c.b16 %v1270, %v1266
        %v1487 = vpack.c.b16 %v1275, %v1271
        %v1488 = vpack.c.b16 %v1276, %v1272
        %v1489 = vpack.c.b16 %v1277, %v1273
        %v1490 = vpack.c.b16 %v1278, %v1274
        %v1491 = vpack.c.b16 %v1283, %v1279
        %v1492 = vpack.c.b16 %v1284, %v1280
        %v1493 = vpack.c.b16 %v1285, %v1281
        %v1494 = vpack.c.b16 %v1286, %v1282
        %v1495 = vpack.c.b16 %v1291, %v1287
        %v1496 = vpack.c.b16 %v1292, %v1288
        %v1497 = vpack.c.b16 %v1293, %v1289
        %v1498 = vpack.c.b16 %v1294, %v1290
        %v1499 = vpack.c.b16 %v1299, %v1295
        %v1500 = vpack.c.b16 %v1300, %v1296
        %v1501 = vpack.c.b16 %v1301, %v1297
        %v1502 = vpack.c.b16 %v1302, %v1298
        %v1503 = vpack.c.b16 %v1307, %v1303
        %v1504 = vpack.c.b16 %v1308, %v1304
        %v1505 = vpack.c.b16 %v1309, %v1305
        %v1506 = vpack.c.b16 %v1310, %v1306
        %v1507 = vpack.c.b16 %v1315, %v1311
        %v1508 = vpack.c.b16 %v1316, %v1312
        %v1509 = vpack.c.b16 %v1317, %v1313
        %v1510 = vpack.c.b16 %v1318, %v1314
        %1703 = vmatprep.subr.bf16.mxu0 %v1320
        %1704 = vmatpush1.bf16.msra.mxu0 %v1319
        %1705 = vmatprep.subr.bf16.mxu0 %v1324
        %1706 = vmatpush1.bf16.msra.mxu0 %v1323
        %1707 = vmatprep.subr.bf16.mxu0 %v1328
        %1708 = vmatpush1.bf16.msra.mxu0 %v1327
        %1709 = vmatprep.subr.bf16.mxu0 %v1332
        %1710 = vmatpush1.bf16.msra.mxu0 %v1331
        %1711 = vmatprep.subr.bf16.mxu0 %v1336
        %1712 = vmatpush1.bf16.msra.mxu0 %v1335
        %1713 = vmatprep.subr.bf16.mxu0 %v1340
        %1714 = vmatpush1.bf16.msra.mxu0 %v1339
        %1715 = vmatprep.subr.bf16.mxu0 %v1344
        %1716 = vmatpush1.bf16.msra.mxu0 %v1343
        %1717 = vmatprep.subr.bf16.mxu0 %v1348
        %1718 = vmatpush1.bf16.msra.mxu0 %v1347
        %1719 = vmatprep.subr.bf16.mxu0 %v1352
        %1720 = vmatpush1.bf16.msra.mxu0 %v1351
        %1721 = vmatprep.subr.bf16.mxu0 %v1356
        %1722 = vmatpush1.bf16.msra.mxu0 %v1355
        %1723 = vmatprep.subr.bf16.mxu0 %v1360
        %1724 = vmatpush1.bf16.msra.mxu0 %v1359
        %1725 = vmatprep.subr.bf16.mxu0 %v1364
        %1726 = vmatpush1.bf16.msra.mxu0 %v1363
        %1727 = vmatprep.subr.bf16.mxu0 %v1368
        %1728 = vmatpush1.bf16.msra.mxu0 %v1367
        %1729 = vmatprep.subr.bf16.mxu0 %v1372
        %1730 = vmatpush1.bf16.msra.mxu0 %v1371
        %1731 = vmatprep.subr.bf16.mxu0 %v1376
        %1732 = vmatpush1.bf16.msra.mxu0 %v1375
        %1733 = vmatprep.subr.bf16.mxu0 %v1380
        %1734 = vmatpush1.bf16.msra.mxu0 %v1379
        %1735 = vmatprep.mubr.bf16.mxu0 %v732
        %1736 = vmatmul.mubr.bf16.gmra.mrb[0].mxu0 %v731
        %v1737 = vpop.f32.mrb[0].mxu0
        %v1738 = vadd.f32 %v705, %v1737
        %v1739 = vpop.f32.mrb[0].mxu0
        %v1740 = vadd.f32 %v709, %v1739
        %v1741 = vpop.f32.mrb[0].mxu0
        %v1742 = vpop.f32.mrb[0].mxu0
        %1743 = vdwg.mxu0
        %1744 = vmatprep.subr.bf16.mxu0 %v1384
        %1745 = vmatpush1.bf16.msra.mxu0 %v1383
        %1746 = vmatprep.subr.bf16.mxu0 %v1388
        %1747 = vmatpush1.bf16.msra.mxu0 %v1387
        %1748 = vmatprep.subr.bf16.mxu0 %v1392
        %1749 = vmatpush1.bf16.msra.mxu0 %v1391
        %1750 = vmatprep.subr.bf16.mxu0 %v1396
        %1751 = vmatpush1.bf16.msra.mxu0 %v1395
        %1752 = vmatprep.subr.bf16.mxu0 %v1400
        %1753 = vmatpush1.bf16.msra.mxu0 %v1399
        %1754 = vmatprep.subr.bf16.mxu0 %v1404
        %1755 = vmatpush1.bf16.msra.mxu0 %v1403
        %1756 = vmatprep.subr.bf16.mxu0 %v1408
        %1757 = vmatpush1.bf16.msra.mxu0 %v1407
        %1758 = vmatprep.subr.bf16.mxu0 %v1412
        %1759 = vmatpush1.bf16.msra.mxu0 %v1411
        %1760 = vmatprep.subr.bf16.mxu0 %v1416
        %1761 = vmatpush1.bf16.msra.mxu0 %v1415
        %1762 = vmatprep.subr.bf16.mxu0 %v1420
        %1763 = vmatpush1.bf16.msra.mxu0 %v1419
        %1764 = vmatprep.subr.bf16.mxu0 %v1424
        %1765 = vmatpush1.bf16.msra.mxu0 %v1423
        %1766 = vmatprep.subr.bf16.mxu0 %v1428
        %1767 = vmatpush1.bf16.msra.mxu0 %v1427
        %1768 = vmatprep.subr.bf16.mxu0 %v1432
        %1769 = vmatpush1.bf16.msra.mxu0 %v1431
        %1770 = vmatprep.subr.bf16.mxu0 %v1436
        %1771 = vmatpush1.bf16.msra.mxu0 %v1435
        %1772 = vmatprep.subr.bf16.mxu0 %v1440
        %1773 = vmatpush1.bf16.msra.mxu0 %v1439
        %1774 = vmatprep.subr.bf16.mxu0 %v1444
        %1775 = vmatpush1.bf16.msra.mxu0 %v1443
        %1776 = vmatprep.mubr.bf16.mxu0 %v734
        %1777 = vmatmul.mubr.bf16.gmra.mrb[0].mxu0 %v733
        %v1778 = vpop.f32.mrb[0].mxu0
        %v1779 = vadd.f32 %v1738, %v1778
        %v1780 = vpop.f32.mrb[0].mxu0
        %v1781 = vadd.f32 %v1740, %v1780
        %v1782 = vpop.f32.mrb[0].mxu0
        %v1783 = vpop.f32.mrb[0].mxu0
        %1784 = vdwg.mxu0
        %1785 = vmatprep.subr.bf16.mxu0 %v1448
        %1786 = vmatpush1.bf16.msra.mxu0 %v1447
        %1787 = vmatprep.subr.bf16.mxu0 %v1452
        %1788 = vmatpush1.bf16.msra.mxu0 %v1451
        %1789 = vmatprep.subr.bf16.mxu0 %v1456
        %1790 = vmatpush1.bf16.msra.mxu0 %v1455
        %1791 = vmatprep.subr.bf16.mxu0 %v1460
        %1792 = vmatpush1.bf16.msra.mxu0 %v1459
        %1793 = vmatprep.subr.bf16.mxu0 %v1464
        %1794 = vmatpush1.bf16.msra.mxu0 %v1463
        %1795 = vmatprep.subr.bf16.mxu0 %v1468
        %1796 = vmatpush1.bf16.msra.mxu0 %v1467
        %1797 = vmatprep.subr.bf16.mxu0 %v1472
        %1798 = vmatpush1.bf16.msra.mxu0 %v1471
        %1799 = vmatprep.subr.bf16.mxu0 %v1476
        %1800 = vmatpush1.bf16.msra.mxu0 %v1475
        %1801 = vmatprep.subr.bf16.mxu0 %v1480
        %1802 = vmatpush1.bf16.msra.mxu0 %v1479
        %1803 = vmatprep.subr.bf16.mxu0 %v1484
        %1804 = vmatpush1.bf16.msra.mxu0 %v1483
        %1805 = vmatprep.subr.bf16.mxu0 %v1488
        %1806 = vmatpush1.bf16.msra.mxu0 %v1487
        %1807 = vmatprep.subr.bf16.mxu0 %v1492
        %1808 = vmatpush1.bf16.msra.mxu0 %v1491
        %1809 = vmatprep.subr.bf16.mxu0 %v1496
        %1810 = vmatpush1.bf16.msra.mxu0 %v1495
        %1811 = vmatprep.subr.bf16.mxu0 %v1500
        %1812 = vmatpush1.bf16.msra.mxu0 %v1499
        %1813 = vmatprep.subr.bf16.mxu0 %v1504
        %1814 = vmatpush1.bf16.msra.mxu0 %v1503
        %1815 = vmatprep.subr.bf16.mxu0 %v1508
        %1816 = vmatpush1.bf16.msra.mxu0 %v1507
        %1817 = vmatprep.mubr.bf16.mxu0 %v736
        %1818 = vmatmul.mubr.bf16.gmra.mrb[0].mxu0 %v735
        %v1819 = vpop.f32.mrb[0].mxu0
        %v1820 = vadd.f32 %v1779, %v1819
        %v1821 = vpop.f32.mrb[0].mxu0
        %v1822 = vadd.f32 %v1781, %v1821
        %v1823 = vpop.f32.mrb[0].mxu0
        %v1824 = vpop.f32.mrb[0].mxu0
        %1825 = vdwg.mxu0
        %1826 = vmatprep.subr.bf16.mxu0 %v1322
        %1827 = vmatpush1.bf16.msra.mxu0 %v1321
        %1828 = vmatprep.subr.bf16.mxu0 %v1326
        %1829 = vmatpush1.bf16.msra.mxu0 %v1325
        %1830 = vmatprep.subr.bf16.mxu0 %v1330
        %1831 = vmatpush1.bf16.msra.mxu0 %v1329
        %1832 = vmatprep.subr.bf16.mxu0 %v1334
        %1833 = vmatpush1.bf16.msra.mxu0 %v1333
        %1834 = vmatprep.subr.bf16.mxu0 %v1338
        %1835 = vmatpush1.bf16.msra.mxu0 %v1337
        %1836 = vmatprep.subr.bf16.mxu0 %v1342
        %1837 = vmatpush1.bf16.msra.mxu0 %v1341
        %1838 = vmatprep.subr.bf16.mxu0 %v1346
        %1839 = vmatpush1.bf16.msra.mxu0 %v1345
        %1840 = vmatprep.subr.bf16.mxu0 %v1350
        %1841 = vmatpush1.bf16.msra.mxu0 %v1349
        %1842 = vmatprep.subr.bf16.mxu0 %v1354
        %1843 = vmatpush1.bf16.msra.mxu0 %v1353
        %1844 = vmatprep.subr.bf16.mxu0 %v1358
        %1845 = vmatpush1.bf16.msra.mxu0 %v1357
        %1846 = vmatprep.subr.bf16.mxu0 %v1362
        %1847 = vmatpush1.bf16.msra.mxu0 %v1361
        %1848 = vmatprep.subr.bf16.mxu0 %v1366
        %1849 = vmatpush1.bf16.msra.mxu0 %v1365
        %1850 = vmatprep.subr.bf16.mxu0 %v1370
        %1851 = vmatpush1.bf16.msra.mxu0 %v1369
        %1852 = vmatprep.subr.bf16.mxu0 %v1374
        %1853 = vmatpush1.bf16.msra.mxu0 %v1373
        %1854 = vmatprep.subr.bf16.mxu0 %v1378
        %1855 = vmatpush1.bf16.msra.mxu0 %v1377
        %1856 = vmatprep.subr.bf16.mxu0 %v1382
        %1857 = vmatpush1.bf16.msra.mxu0 %v1381
        %1858 = vmatprep.mubr.bf16.mxu0 %v732
        %1859 = vmatmul.mubr.bf16.gmra.mrb[0].mxu0 %v731
        %v1860 = vpop.f32.mrb[0].mxu0
        %v1861 = vadd.f32 %v713, %v1860
        %v1862 = vpop.f32.mrb[0].mxu0
        %v1863 = vadd.f32 %v717, %v1862
        %v1864 = vpop.f32.mrb[0].mxu0
        %v1865 = vpop.f32.mrb[0].mxu0
        %1866 = vdwg.mxu0
        %1867 = vmatprep.subr.bf16.mxu0 %v1386
        %1868 = vmatpush1.bf16.msra.mxu0 %v1385
        %1869 = vmatprep.subr.bf16.mxu0 %v1390
        %1870 = vmatpush1.bf16.msra.mxu0 %v1389
        %1871 = vmatprep.subr.bf16.mxu0 %v1394
        %1872 = vmatpush1.bf16.msra.mxu0 %v1393
        %1873 = vmatprep.subr.bf16.mxu0 %v1398
        %1874 = vmatpush1.bf16.msra.mxu0 %v1397
        %1875 = vmatprep.subr.bf16.mxu0 %v1402
        %1876 = vmatpush1.bf16.msra.mxu0 %v1401
        %1877 = vmatprep.subr.bf16.mxu0 %v1406
        %1878 = vmatpush1.bf16.msra.mxu0 %v1405
        %1879 = vmatprep.subr.bf16.mxu0 %v1410
        %1880 = vmatpush1.bf16.msra.mxu0 %v1409
        %1881 = vmatprep.subr.bf16.mxu0 %v1414
        %1882 = vmatpush1.bf16.msra.mxu0 %v1413
        %1883 = vmatprep.subr.bf16.mxu0 %v1418
        %1884 = vmatpush1.bf16.msra.mxu0 %v1417
        %1885 = vmatprep.subr.bf16.mxu0 %v1422
        %1886 = vmatpush1.bf16.msra.mxu0 %v1421
        %1887 = vmatprep.subr.bf16.mxu0 %v1426
        %1888 = vmatpush1.bf16.msra.mxu0 %v1425
        %1889 = vmatprep.subr.bf16.mxu0 %v1430
        %1890 = vmatpush1.bf16.msra.mxu0 %v1429
        %1891 = vmatprep.subr.bf16.mxu0 %v1434
        %1892 = vmatpush1.bf16.msra.mxu0 %v1433
        %1893 = vmatprep.subr.bf16.mxu0 %v1438
        %1894 = vmatpush1.bf16.msra.mxu0 %v1437
        %1895 = vmatprep.subr.bf16.mxu0 %v1442
        %1896 = vmatpush1.bf16.msra.mxu0 %v1441
        %1897 = vmatprep.subr.bf16.mxu0 %v1446
        %1898 = vmatpush1.bf16.msra.mxu0 %v1445
        %1899 = vmatprep.mubr.bf16.mxu0 %v734
        %1900 = vmatmul.mubr.bf16.gmra.mrb[0].mxu0 %v733
        %v1901 = vpop.f32.mrb[0].mxu0
        %v1902 = vadd.f32 %v1861, %v1901
        %v1903 = vpop.f32.mrb[0].mxu0
        %v1904 = vadd.f32 %v1863, %v1903
        %v1905 = vpop.f32.mrb[0].mxu0
        %v1906 = vpop.f32.mrb[0].mxu0
        %1907 = vdwg.mxu0
        %1908 = vmatprep.subr.bf16.mxu0 %v1450
        %1909 = vmatpush1.bf16.msra.mxu0 %v1449
        %1910 = vmatprep.subr.bf16.mxu0 %v1454
        %1911 = vmatpush1.bf16.msra.mxu0 %v1453
        %1912 = vmatprep.subr.bf16.mxu0 %v1458
        %1913 = vmatpush1.bf16.msra.mxu0 %v1457
        %1914 = vmatprep.subr.bf16.mxu0 %v1462
        %1915 = vmatpush1.bf16.msra.mxu0 %v1461
        %1916 = vmatprep.subr.bf16.mxu0 %v1466
        %1917 = vmatpush1.bf16.msra.mxu0 %v1465
        %1918 = vmatprep.subr.bf16.mxu0 %v1470
        %1919 = vmatpush1.bf16.msra.mxu0 %v1469
        %1920 = vmatprep.subr.bf16.mxu0 %v1474
        %1921 = vmatpush1.bf16.msra.mxu0 %v1473
        %1922 = vmatprep.subr.bf16.mxu0 %v1478
        %1923 = vmatpush1.bf16.msra.mxu0 %v1477
        %1924 = vmatprep.subr.bf16.mxu0 %v1482
        %1925 = vmatpush1.bf16.msra.mxu0 %v1481
        %1926 = vmatprep.subr.bf16.mxu0 %v1486
        %1927 = vmatpush1.bf16.msra.mxu0 %v1485
        %1928 = vmatprep.subr.bf16.mxu0 %v1490
        %1929 = vmatpush1.bf16.msra.mxu0 %v1489
        %1930 = vmatprep.subr.bf16.mxu0 %v1494
        %1931 = vmatpush1.bf16.msra.mxu0 %v1493
        %1932 = vmatprep.subr.bf16.mxu0 %v1498
        %1933 = vmatpush1.bf16.msra.mxu0 %v1497
        %1934 = vmatprep.subr.bf16.mxu0 %v1502
        %1935 = vmatpush1.bf16.msra.mxu0 %v1501
        %1936 = vmatprep.subr.bf16.mxu0 %v1506
        %1937 = vmatpush1.bf16.msra.mxu0 %v1505
        %1938 = vmatprep.subr.bf16.mxu0 %v1510
        %1939 = vmatpush1.bf16.msra.mxu0 %v1509
        %1940 = vmatprep.mubr.bf16.mxu0 %v736
        %1941 = vmatmul.mubr.bf16.gmra.mrb[0].mxu0 %v735
        %v1942 = vpop.f32.mrb[0].mxu0
        %v1943 = vadd.f32 %v1902, %v1942
        %v1944 = vpop.f32.mrb[0].mxu0
        %v1945 = vadd.f32 %v1904, %v1944
        %v1946 = vpop.f32.mrb[0].mxu0
        %v1947 = vpop.f32.mrb[0].mxu0
        %1948 = vdwg.mxu0
        %v1949 = vmax.f32 %v1820, 0.0
        %v1950 = vmax.f32 %v1822, 0.0
        %v1951 = vmax.f32 %v1943, 0.0
        %v1952 = vmax.f32 %v1945, 0.0
        %v1953 = vpack.c.bf16 %v1949, %v1949
        %v1954 = vpack.c.bf16 %v1950, %v1950
        %v1955 = vpack.c.bf16 %v1951, %v1951
        %v1956 = vpack.c.bf16 %v1952, %v1952
        %v1957 = vld [vmem:[%s4] sm:$0xff]
        %v1958 = vld [vmem:[%s4 + $0x8] sm:$0xff]
        %v1959 = vld [vmem:[%s4 + $0x10] sm:$0xff]
        %v1960 = vld [vmem:[%s4 + $0x18] sm:$0xff]
        %v1961 = vld [vmem:[%s4 + $0x20] sm:$0xff]
        %v1962 = vld [vmem:[%s4 + $0x28] sm:$0xff]
        %v1963 = vld [vmem:[%s4 + $0x30] sm:$0xff]
        %v1964 = vld [vmem:[%s4 + $0x38] sm:$0xff]
        %v1965 = vld [vmem:[%s4 + $0x40] sm:$0xff]
        %v1966 = vld [vmem:[%s4 + $0x48] sm:$0xff]
        %v1967 = vld [vmem:[%s4 + $0x50] sm:$0xff]
        %v1968 = vld [vmem:[%s4 + $0x58] sm:$0xff]
        %v1969 = vld [vmem:[%s4 + $0x60] sm:$0xff]
        %v1970 = vld [vmem:[%s4 + $0x68] sm:$0xff]
        %v1971 = vld [vmem:[%s4 + $0x70] sm:$0xff]
        %v1972 = vld [vmem:[%s4 + $0x78] sm:$0xff]
        %v1973 = vld [vmem:[%s4 + $0x80] sm:$0xff]
        %v1974 = vld [vmem:[%s4 + $0x88] sm:$0xff]
        %v1975 = vld [vmem:[%s4 + $0x90] sm:$0xff]
        %v1976 = vld [vmem:[%s4 + $0x98] sm:$0xff]
        %v1977 = vld [vmem:[%s4 + $0xa0] sm:$0xff]
        %v1978 = vld [vmem:[%s4 + $0xa8] sm:$0xff]
        %v1979 = vld [vmem:[%s4 + $0xb0] sm:$0xff]
        %v1980 = vld [vmem:[%s4 + $0xb8] sm:$0xff]
        %v1981 = vld [vmem:[%s4 + $0xc0] sm:$0xff]
        %v1982 = vld [vmem:[%s4 + $0xc8] sm:$0xff]
        %v1983 = vld [vmem:[%s4 + $0xd0] sm:$0xff]
        %v1984 = vld [vmem:[%s4 + $0xd8] sm:$0xff]
        %v1985 = vld [vmem:[%s4 + $0xe0] sm:$0xff]
        %v1986 = vld [vmem:[%s4 + $0xe8] sm:$0xff]
        %v1987 = vld [vmem:[%s4 + $0xf0] sm:$0xff]
        %v1988 = vld [vmem:[%s4 + $0xf8] sm:$0xff]
        %v1989 = vld [vmem:[%s4 + $0x100] sm:$0xff]
        %v1990 = vld [vmem:[%s4 + $0x108] sm:$0xff]
        %v1991 = vld [vmem:[%s4 + $0x110] sm:$0xff]
        %v1992 = vld [vmem:[%s4 + $0x118] sm:$0xff]
        %v1993 = vld [vmem:[%s4 + $0x120] sm:$0xff]
        %v1994 = vld [vmem:[%s4 + $0x128] sm:$0xff]
        %v1995 = vld [vmem:[%s4 + $0x130] sm:$0xff]
        %v1996 = vld [vmem:[%s4 + $0x138] sm:$0xff]
        %v1997 = vld [vmem:[%s4 + $0x140] sm:$0xff]
        %v1998 = vld [vmem:[%s4 + $0x148] sm:$0xff]
        %v1999 = vld [vmem:[%s4 + $0x150] sm:$0xff]
        %v2000 = vld [vmem:[%s4 + $0x158] sm:$0xff]
        %v2001 = vld [vmem:[%s4 + $0x160] sm:$0xff]
        %v2002 = vld [vmem:[%s4 + $0x168] sm:$0xff]
        %v2003 = vld [vmem:[%s4 + $0x170] sm:$0xff]
        %v2004 = vld [vmem:[%s4 + $0x178] sm:$0xff]
        %v2005 = vld [vmem:[%s4 + $0x180] sm:$0xff]
        %v2006 = vld [vmem:[%s4 + $0x188] sm:$0xff]
        %v2007 = vld [vmem:[%s4 + $0x190] sm:$0xff]
        %v2008 = vld [vmem:[%s4 + $0x198] sm:$0xff]
        %v2009 = vld [vmem:[%s4 + $0x1a0] sm:$0xff]
        %v2010 = vld [vmem:[%s4 + $0x1a8] sm:$0xff]
        %v2011 = vld [vmem:[%s4 + $0x1b0] sm:$0xff]
        %v2012 = vld [vmem:[%s4 + $0x1b8] sm:$0xff]
        %v2013 = vld [vmem:[%s4 + $0x1c0] sm:$0xff]
        %v2014 = vld [vmem:[%s4 + $0x1c8] sm:$0xff]
        %v2015 = vld [vmem:[%s4 + $0x1d0] sm:$0xff]
        %v2016 = vld [vmem:[%s4 + $0x1d8] sm:$0xff]
        %v2017 = vld [vmem:[%s4 + $0x1e0] sm:$0xff]
        %v2018 = vld [vmem:[%s4 + $0x1e8] sm:$0xff]
        %v2019 = vld [vmem:[%s4 + $0x1f0] sm:$0xff]
        %v2020 = vld [vmem:[%s4 + $0x1f8] sm:$0xff]
        %v2022 = vlaneseq
        %v2023 = vshrl.u32 %v2022, 7
        %v2024 = vsub.s32 0, %v2023
        %v2025 = vrot.slane %v438, %v2024
        %v2026 = vlaneseq
        %v2027 = vshrl.u32 %v2026, 7
        %v2028 = vsub.s32 1, %v2027
        %v2029 = vrot.slane %v438, %v2028
        %v2096 = vunpack.c.l.b16 %v1957
        %v2097 = vunpack.c.h.b16 %v1957
        %v2098 = vunpack.c.l.b16 %v1958
        %v2099 = vunpack.c.h.b16 %v1958
        %v2100 = vunpack.c.l.b16 %v1959
        %v2101 = vunpack.c.h.b16 %v1959
        %v2102 = vunpack.c.l.b16 %v1960
        %v2103 = vunpack.c.h.b16 %v1960
        %v2104 = vunpack.c.l.b16 %v1961
        %v2105 = vunpack.c.h.b16 %v1961
        %v2106 = vunpack.c.l.b16 %v1962
        %v2107 = vunpack.c.h.b16 %v1962
        %v2108 = vunpack.c.l.b16 %v1963
        %v2109 = vunpack.c.h.b16 %v1963
        %v2110 = vunpack.c.l.b16 %v1964
        %v2111 = vunpack.c.h.b16 %v1964
        %v2112 = vunpack.c.l.b16 %v1965
        %v2113 = vunpack.c.h.b16 %v1965
        %v2114 = vunpack.c.l.b16 %v1966
        %v2115 = vunpack.c.h.b16 %v1966
        %v2116 = vunpack.c.l.b16 %v1967
        %v2117 = vunpack.c.h.b16 %v1967
        %v2118 = vunpack.c.l.b16 %v1968
        %v2119 = vunpack.c.h.b16 %v1968
        %v2120 = vunpack.c.l.b16 %v1969
        %v2121 = vunpack.c.h.b16 %v1969
        %v2122 = vunpack.c.l.b16 %v1970
        %v2123 = vunpack.c.h.b16 %v1970
        %v2124 = vunpack.c.l.b16 %v1971
        %v2125 = vunpack.c.h.b16 %v1971
        %v2126 = vunpack.c.l.b16 %v1972
        %v2127 = vunpack.c.h.b16 %v1972
        %v2128 = vunpack.c.l.b16 %v1973
        %v2129 = vunpack.c.h.b16 %v1973
        %v2130 = vunpack.c.l.b16 %v1974
        %v2131 = vunpack.c.h.b16 %v1974
        %v2132 = vunpack.c.l.b16 %v1975
        %v2133 = vunpack.c.h.b16 %v1975
        %v2134 = vunpack.c.l.b16 %v1976
        %v2135 = vunpack.c.h.b16 %v1976
        %v2136 = vunpack.c.l.b16 %v1977
        %v2137 = vunpack.c.h.b16 %v1977
        %v2138 = vunpack.c.l.b16 %v1978
        %v2139 = vunpack.c.h.b16 %v1978
        %v2140 = vunpack.c.l.b16 %v1979
        %v2141 = vunpack.c.h.b16 %v1979
        %v2142 = vunpack.c.l.b16 %v1980
        %v2143 = vunpack.c.h.b16 %v1980
        %v2144 = vunpack.c.l.b16 %v1981
        %v2145 = vunpack.c.h.b16 %v1981
        %v2146 = vunpack.c.l.b16 %v1982
        %v2147 = vunpack.c.h.b16 %v1982
        %v2148 = vunpack.c.l.b16 %v1983
        %v2149 = vunpack.c.h.b16 %v1983
        %v2150 = vunpack.c.l.b16 %v1984
        %v2151 = vunpack.c.h.b16 %v1984
        %v2152 = vunpack.c.l.b16 %v1985
        %v2153 = vunpack.c.h.b16 %v1985
        %v2154 = vunpack.c.l.b16 %v1986
        %v2155 = vunpack.c.h.b16 %v1986
        %v2156 = vunpack.c.l.b16 %v1987
        %v2157 = vunpack.c.h.b16 %v1987
        %v2158 = vunpack.c.l.b16 %v1988
        %v2159 = vunpack.c.h.b16 %v1988
        %v2160 = vunpack.c.l.b16 %v1989
        %v2161 = vunpack.c.h.b16 %v1989
        %v2162 = vunpack.c.l.b16 %v1990
        %v2163 = vunpack.c.h.b16 %v1990
        %v2164 = vunpack.c.l.b16 %v1991
        %v2165 = vunpack.c.h.b16 %v1991
        %v2166 = vunpack.c.l.b16 %v1992
        %v2167 = vunpack.c.h.b16 %v1992
        %v2168 = vunpack.c.l.b16 %v1993
        %v2169 = vunpack.c.h.b16 %v1993
        %v2170 = vunpack.c.l.b16 %v1994
        %v2171 = vunpack.c.h.b16 %v1994
        %v2172 = vunpack.c.l.b16 %v1995
        %v2173 = vunpack.c.h.b16 %v1995
        %v2174 = vunpack.c.l.b16 %v1996
        %v2175 = vunpack.c.h.b16 %v1996
        %v2176 = vunpack.c.l.b16 %v1997
        %v2177 = vunpack.c.h.b16 %v1997
        %v2178 = vunpack.c.l.b16 %v1998
        %v2179 = vunpack.c.h.b16 %v1998
        %v2180 = vunpack.c.l.b16 %v1999
        %v2181 = vunpack.c.h.b16 %v1999
        %v2182 = vunpack.c.l.b16 %v2000
        %v2183 = vunpack.c.h.b16 %v2000
        %v2184 = vunpack.c.l.b16 %v2001
        %v2185 = vunpack.c.h.b16 %v2001
        %v2186 = vunpack.c.l.b16 %v2002
        %v2187 = vunpack.c.h.b16 %v2002
        %v2188 = vunpack.c.l.b16 %v2003
        %v2189 = vunpack.c.h.b16 %v2003
        %v2190 = vunpack.c.l.b16 %v2004
        %v2191 = vunpack.c.h.b16 %v2004
        %v2192 = vunpack.c.l.b16 %v2005
        %v2193 = vunpack.c.h.b16 %v2005
        %v2194 = vunpack.c.l.b16 %v2006
        %v2195 = vunpack.c.h.b16 %v2006
        %v2196 = vunpack.c.l.b16 %v2007
        %v2197 = vunpack.c.h.b16 %v2007
        %v2198 = vunpack.c.l.b16 %v2008
        %v2199 = vunpack.c.h.b16 %v2008
        %v2200 = vunpack.c.l.b16 %v2009
        %v2201 = vunpack.c.h.b16 %v2009
        %v2202 = vunpack.c.l.b16 %v2010
        %v2203 = vunpack.c.h.b16 %v2010
        %v2204 = vunpack.c.l.b16 %v2011
        %v2205 = vunpack.c.h.b16 %v2011
        %v2206 = vunpack.c.l.b16 %v2012
        %v2207 = vunpack.c.h.b16 %v2012
        %v2208 = vunpack.c.l.b16 %v2013
        %v2209 = vunpack.c.h.b16 %v2013
        %v2210 = vunpack.c.l.b16 %v2014
        %v2211 = vunpack.c.h.b16 %v2014
        %v2212 = vunpack.c.l.b16 %v2015
        %v2213 = vunpack.c.h.b16 %v2015
        %v2214 = vunpack.c.l.b16 %v2016
        %v2215 = vunpack.c.h.b16 %v2016
        %v2216 = vunpack.c.l.b16 %v2017
        %v2217 = vunpack.c.h.b16 %v2017
        %v2218 = vunpack.c.l.b16 %v2018
        %v2219 = vunpack.c.h.b16 %v2018
        %v2220 = vunpack.c.l.b16 %v2019
        %v2221 = vunpack.c.h.b16 %v2019
        %v2222 = vunpack.c.l.b16 %v2020
        %v2223 = vunpack.c.h.b16 %v2020
        %v2224 = vpack.c.b16 %v2098, %v2096
        %v2225 = vpack.c.b16 %v2099, %v2097
        %v2226 = vpack.c.b16 %v2102, %v2100
        %v2227 = vpack.c.b16 %v2103, %v2101
        %v2228 = vpack.c.b16 %v2106, %v2104
        %v2229 = vpack.c.b16 %v2107, %v2105
        %v2230 = vpack.c.b16 %v2110, %v2108
        %v2231 = vpack.c.b16 %v2111, %v2109
        %v2232 = vpack.c.b16 %v2114, %v2112
        %v2233 = vpack.c.b16 %v2115, %v2113
        %v2234 = vpack.c.b16 %v2118, %v2116
        %v2235 = vpack.c.b16 %v2119, %v2117
        %v2236 = vpack.c.b16 %v2122, %v2120
        %v2237 = vpack.c.b16 %v2123, %v2121
        %v2238 = vpack.c.b16 %v2126, %v2124
        %v2239 = vpack.c.b16 %v2127, %v2125
        %v2240 = vpack.c.b16 %v2130, %v2128
        %v2241 = vpack.c.b16 %v2131, %v2129
        %v2242 = vpack.c.b16 %v2134, %v2132
        %v2243 = vpack.c.b16 %v2135, %v2133
        %v2244 = vpack.c.b16 %v2138, %v2136
        %v2245 = vpack.c.b16 %v2139, %v2137
        %v2246 = vpack.c.b16 %v2142, %v2140
        %v2247 = vpack.c.b16 %v2143, %v2141
        %v2248 = vpack.c.b16 %v2146, %v2144
        %v2249 = vpack.c.b16 %v2147, %v2145
        %v2250 = vpack.c.b16 %v2150, %v2148
        %v2251 = vpack.c.b16 %v2151, %v2149
        %v2252 = vpack.c.b16 %v2154, %v2152
        %v2253 = vpack.c.b16 %v2155, %v2153
        %v2254 = vpack.c.b16 %v2158, %v2156
        %v2255 = vpack.c.b16 %v2159, %v2157
        %v2256 = vpack.c.b16 %v2162, %v2160
        %v2257 = vpack.c.b16 %v2163, %v2161
        %v2258 = vpack.c.b16 %v2166, %v2164
        %v2259 = vpack.c.b16 %v2167, %v2165
        %v2260 = vpack.c.b16 %v2170, %v2168
        %v2261 = vpack.c.b16 %v2171, %v2169
        %v2262 = vpack.c.b16 %v2174, %v2172
        %v2263 = vpack.c.b16 %v2175, %v2173
        %v2264 = vpack.c.b16 %v2178, %v2176
        %v2265 = vpack.c.b16 %v2179, %v2177
        %v2266 = vpack.c.b16 %v2182, %v2180
        %v2267 = vpack.c.b16 %v2183, %v2181
        %v2268 = vpack.c.b16 %v2186, %v2184
        %v2269 = vpack.c.b16 %v2187, %v2185
        %v2270 = vpack.c.b16 %v2190, %v2188
        %v2271 = vpack.c.b16 %v2191, %v2189
        %v2272 = vpack.c.b16 %v2194, %v2192
        %v2273 = vpack.c.b16 %v2195, %v2193
        %v2274 = vpack.c.b16 %v2198, %v2196
        %v2275 = vpack.c.b16 %v2199, %v2197
        %v2276 = vpack.c.b16 %v2202, %v2200
        %v2277 = vpack.c.b16 %v2203, %v2201
        %v2278 = vpack.c.b16 %v2206, %v2204
        %v2279 = vpack.c.b16 %v2207, %v2205
        %v2280 = vpack.c.b16 %v2210, %v2208
        %v2281 = vpack.c.b16 %v2211, %v2209
        %v2282 = vpack.c.b16 %v2214, %v2212
        %v2283 = vpack.c.b16 %v2215, %v2213
        %v2284 = vpack.c.b16 %v2218, %v2216
        %v2285 = vpack.c.b16 %v2219, %v2217
        %v2286 = vpack.c.b16 %v2222, %v2220
        %v2287 = vpack.c.b16 %v2223, %v2221
        %2352 = vmatprep.subr.bf16.mxu0 %v2225
        %2353 = vmatpush1.bf16.msra.mxu0 %v2224
        %2354 = vmatprep.subr.bf16.mxu0 %v2227
        %2355 = vmatpush1.bf16.msra.mxu0 %v2226
        %2356 = vmatprep.subr.bf16.mxu0 %v2229
        %2357 = vmatpush1.bf16.msra.mxu0 %v2228
        %2358 = vmatprep.subr.bf16.mxu0 %v2231
        %2359 = vmatpush1.bf16.msra.mxu0 %v2230
        %2360 = vmatprep.subr.bf16.mxu0 %v2233
        %2361 = vmatpush1.bf16.msra.mxu0 %v2232
        %2362 = vmatprep.subr.bf16.mxu0 %v2235
        %2363 = vmatpush1.bf16.msra.mxu0 %v2234
        %2364 = vmatprep.subr.bf16.mxu0 %v2237
        %2365 = vmatpush1.bf16.msra.mxu0 %v2236
        %2366 = vmatprep.subr.bf16.mxu0 %v2239
        %2367 = vmatpush1.bf16.msra.mxu0 %v2238
        %2368 = vmatprep.subr.bf16.mxu0 %v2241
        %2369 = vmatpush1.bf16.msra.mxu0 %v2240
        %2370 = vmatprep.subr.bf16.mxu0 %v2243
        %2371 = vmatpush1.bf16.msra.mxu0 %v2242
        %2372 = vmatprep.subr.bf16.mxu0 %v2245
        %2373 = vmatpush1.bf16.msra.mxu0 %v2244
        %2374 = vmatprep.subr.bf16.mxu0 %v2247
        %2375 = vmatpush1.bf16.msra.mxu0 %v2246
        %2376 = vmatprep.subr.bf16.mxu0 %v2249
        %2377 = vmatpush1.bf16.msra.mxu0 %v2248
        %2378 = vmatprep.subr.bf16.mxu0 %v2251
        %2379 = vmatpush1.bf16.msra.mxu0 %v2250
        %2380 = vmatprep.subr.bf16.mxu0 %v2253
        %2381 = vmatpush1.bf16.msra.mxu0 %v2252
        %2382 = vmatprep.subr.bf16.mxu0 %v2255
        %2383 = vmatpush1.bf16.msra.mxu0 %v2254
        %2384 = vmatprep.mubr.bf16.mxu0 %v1954
        %2385 = vmatmul.mubr.bf16.gmra.mrb[0].mxu0 %v1953
        %v2386 = vpop.f32.mrb[0].mxu0
        %v2387 = vadd.f32 %v2025, %v2386
        %v2388 = vpop.f32.mrb[0].mxu0
        %v2389 = vadd.f32 %v2029, %v2388
        %v2390 = vpop.f32.mrb[0].mxu0
        %v2391 = vpop.f32.mrb[0].mxu0
        %2392 = vdwg.mxu0
        %2393 = vmatprep.subr.bf16.mxu0 %v2257
        %2394 = vmatpush1.bf16.msra.mxu0 %v2256
        %2395 = vmatprep.subr.bf16.mxu0 %v2259
        %2396 = vmatpush1.bf16.msra.mxu0 %v2258
        %2397 = vmatprep.subr.bf16.mxu0 %v2261
        %2398 = vmatpush1.bf16.msra.mxu0 %v2260
        %2399 = vmatprep.subr.bf16.mxu0 %v2263
        %2400 = vmatpush1.bf16.msra.mxu0 %v2262
        %2401 = vmatprep.subr.bf16.mxu0 %v2265
        %2402 = vmatpush1.bf16.msra.mxu0 %v2264
        %2403 = vmatprep.subr.bf16.mxu0 %v2267
        %2404 = vmatpush1.bf16.msra.mxu0 %v2266
        %2405 = vmatprep.subr.bf16.mxu0 %v2269
        %2406 = vmatpush1.bf16.msra.mxu0 %v2268
        %2407 = vmatprep.subr.bf16.mxu0 %v2271
        %2408 = vmatpush1.bf16.msra.mxu0 %v2270
        %2409 = vmatprep.subr.bf16.mxu0 %v2273
        %2410 = vmatpush1.bf16.msra.mxu0 %v2272
        %2411 = vmatprep.subr.bf16.mxu0 %v2275
        %2412 = vmatpush1.bf16.msra.mxu0 %v2274
        %2413 = vmatprep.subr.bf16.mxu0 %v2277
        %2414 = vmatpush1.bf16.msra.mxu0 %v2276
        %2415 = vmatprep.subr.bf16.mxu0 %v2279
        %2416 = vmatpush1.bf16.msra.mxu0 %v2278
        %2417 = vmatprep.subr.bf16.mxu0 %v2281
        %2418 = vmatpush1.bf16.msra.mxu0 %v2280
        %2419 = vmatprep.subr.bf16.mxu0 %v2283
        %2420 = vmatpush1.bf16.msra.mxu0 %v2282
        %2421 = vmatprep.subr.bf16.mxu0 %v2285
        %2422 = vmatpush1.bf16.msra.mxu0 %v2284
        %2423 = vmatprep.subr.bf16.mxu0 %v2287
        %2424 = vmatpush1.bf16.msra.mxu0 %v2286
        %2425 = vmatprep.mubr.bf16.mxu0 %v1956
        %2426 = vmatmul.mubr.bf16.gmra.mrb[0].mxu0 %v1955
        %v2427 = vpop.f32.mrb[0].mxu0
        %v2428 = vadd.f32 %v2387, %v2427
        %v2429 = vpop.f32.mrb[0].mxu0
        %v2430 = vadd.f32 %v2389, %v2429
        %v2431 = vpop.f32.mrb[0].mxu0
        %v2432 = vpop.f32.mrb[0].mxu0
        %2433 = vdwg.mxu0
        %v2434 = vmax.f32 %v2428, 0.0
        %v2435 = vmax.f32 %v2430, 0.0
        %v2436 = vpack.c.bf16 %v2434, %v2434
        %v2437 = vpack.c.bf16 %v2435, %v2435
        %v2439 = vlaneseq
        %v2440 = vshrl.u32 %v2439, 7
        %v2441 = vsub.s32 0, %v2440
        %v2442 = vrot.slane %v439, %v2441
        %v2476 = vunpack.c.l.b16 %v442
        %v2477 = vunpack.c.l.b16 %v443
        %v2478 = vunpack.c.l.b16 %v444
        %v2479 = vunpack.c.l.b16 %v445
        %v2480 = vunpack.c.l.b16 %v446
        %v2481 = vunpack.c.l.b16 %v447
        %v2482 = vunpack.c.l.b16 %v448
        %v2483 = vunpack.c.l.b16 %v449
        %v2484 = vunpack.c.l.b16 %v450
        %v2485 = vunpack.c.l.b16 %v451
        %v2486 = vunpack.c.l.b16 %v452
        %v2487 = vunpack.c.l.b16 %v453
        %v2488 = vunpack.c.l.b16 %v454
        %v2489 = vunpack.c.l.b16 %v455
        %v2490 = vunpack.c.l.b16 %v456
        %v2491 = vunpack.c.l.b16 %v457
        %v2492 = vunpack.c.l.b16 %v458
        %v2493 = vunpack.c.l.b16 %v459
        %v2494 = vunpack.c.l.b16 %v460
        %v2495 = vunpack.c.l.b16 %v461
        %v2496 = vunpack.c.l.b16 %v462
        %v2497 = vunpack.c.l.b16 %v463
        %v2498 = vunpack.c.l.b16 %v464
        %v2499 = vunpack.c.l.b16 %v465
        %v2500 = vunpack.c.l.b16 %v466
        %v2501 = vunpack.c.l.b16 %v467
        %v2502 = vunpack.c.l.b16 %v468
        %v2503 = vunpack.c.l.b16 %v469
        %v2504 = vunpack.c.l.b16 %v470
        %v2505 = vunpack.c.l.b16 %v471
        %v2506 = vunpack.c.l.b16 %v472
        %v2507 = vunpack.c.l.b16 %v473
        %v2508 = vpack.c.b16 %v2477, %v2476
        %v2509 = vpack.c.b16 %v2479, %v2478
        %v2510 = vpack.c.b16 %v2481, %v2480
        %v2511 = vpack.c.b16 %v2483, %v2482
        %v2512 = vpack.c.b16 %v2485, %v2484
        %v2513 = vpack.c.b16 %v2487, %v2486
        %v2514 = vpack.c.b16 %v2489, %v2488
        %v2515 = vpack.c.b16 %v2491, %v2490
        %v2516 = vpack.c.b16 %v2493, %v2492
        %v2517 = vpack.c.b16 %v2495, %v2494
        %v2518 = vpack.c.b16 %v2497, %v2496
        %v2519 = vpack.c.b16 %v2499, %v2498
        %v2520 = vpack.c.b16 %v2501, %v2500
        %v2521 = vpack.c.b16 %v2503, %v2502
        %v2522 = vpack.c.b16 %v2505, %v2504
        %v2523 = vpack.c.b16 %v2507, %v2506
        %2540 = vmatprep.subr.bf16.mxu0 0
        %2541 = vmatpush1.bf16.msra.mxu0 %v2508
        %2542 = vmatprep.subr.bf16.mxu0 0
        %2543 = vmatpush1.bf16.msra.mxu0 %v2509
        %2544 = vmatprep.subr.bf16.mxu0 0
        %2545 = vmatpush1.bf16.msra.mxu0 %v2510
        %2546 = vmatprep.subr.bf16.mxu0 0
        %2547 = vmatpush1.bf16.msra.mxu0 %v2511
        %2548 = vmatprep.subr.bf16.mxu0 0
        %2549 = vmatpush1.bf16.msra.mxu0 %v2512
        %2550 = vmatprep.subr.bf16.mxu0 0
        %2551 = vmatpush1.bf16.msra.mxu0 %v2513
        %2552 = vmatprep.subr.bf16.mxu0 0
        %2553 = vmatpush1.bf16.msra.mxu0 %v2514
        %2554 = vmatprep.subr.bf16.mxu0 0
        %2555 = vmatpush1.bf16.msra.mxu0 %v2515
        %2556 = vmatprep.subr.bf16.mxu0 0
        %2557 = vmatpush1.bf16.msra.mxu0 %v2516
        %2558 = vmatprep.subr.bf16.mxu0 0
        %2559 = vmatpush1.bf16.msra.mxu0 %v2517
        %2560 = vmatprep.subr.bf16.mxu0 0
        %2561 = vmatpush1.bf16.msra.mxu0 %v2518
        %2562 = vmatprep.subr.bf16.mxu0 0
        %2563 = vmatpush1.bf16.msra.mxu0 %v2519
        %2564 = vmatprep.subr.bf16.mxu0 0
        %2565 = vmatpush1.bf16.msra.mxu0 %v2520
        %2566 = vmatprep.subr.bf16.mxu0 0
        %2567 = vmatpush1.bf16.msra.mxu0 %v2521
        %2568 = vmatprep.subr.bf16.mxu0 0
        %2569 = vmatpush1.bf16.msra.mxu0 %v2522
        %2570 = vmatprep.subr.bf16.mxu0 0
        %2571 = vmatpush1.bf16.msra.mxu0 %v2523
        %2572 = vmatprep.mubr.bf16.mxu0 %v2437
        %2573 = vmatmul.mubr.bf16.gmra.mrb[0].mxu0 %v2436
        %v2574 = vpop.f32.mrb[0].mxu0
        %v2575 = vadd.f32 %v2442, %v2574
        %v2576 = vpop.f32.mrb[0].mxu0
        %v2577 = vpop.f32.mrb[0].mxu0
        %v2578 = vpop.f32.mrb[0].mxu0
        %2579 = vdwg.mxu0
        %v2580 = vmax.f32 %v2575, 0.0
        %v2581 = vpack.c.bf16 %v2580, %v2580
        %v2583 = vlaneseq
        %v2584 = vshrl.u32 %v2583, 7
        %v2585 = vsub.s32 0, %v2584
        %v2586 = vrot.slane %v440, %v2585
        %v2604 = vunpack.c.l.b16 %v474
        %v2605 = vunpack.c.l.b16 %v475
        %v2606 = vunpack.c.l.b16 %v476
        %v2607 = vunpack.c.l.b16 %v477
        %v2608 = vunpack.c.l.b16 %v478
        %v2609 = vunpack.c.l.b16 %v479
        %v2610 = vunpack.c.l.b16 %v480
        %v2611 = vunpack.c.l.b16 %v481
        %v2612 = vunpack.c.l.b16 %v482
        %v2613 = vunpack.c.l.b16 %v483
        %v2614 = vunpack.c.l.b16 %v484
        %v2615 = vunpack.c.l.b16 %v485
        %v2616 = vunpack.c.l.b16 %v486
        %v2617 = vunpack.c.l.b16 %v487
        %v2618 = vunpack.c.l.b16 %v488
        %v2619 = vunpack.c.l.b16 %v489
        %v2620 = vpack.c.b16 %v2605, %v2604
        %v2621 = vpack.c.b16 %v2607, %v2606
        %v2622 = vpack.c.b16 %v2609, %v2608
        %v2623 = vpack.c.b16 %v2611, %v2610
        %v2624 = vpack.c.b16 %v2613, %v2612
        %v2625 = vpack.c.b16 %v2615, %v2614
        %v2626 = vpack.c.b16 %v2617, %v2616
        %v2627 = vpack.c.b16 %v2619, %v2618
        %2636 = vmatprep.subr.bf16.mxu0 0
        %2637 = vmatpush1.bf16.msra.mxu0 %v2620
        %2638 = vmatprep.subr.bf16.mxu0 0
        %2639 = vmatpush1.bf16.msra.mxu0 %v2621
        %2640 = vmatprep.subr.bf16.mxu0 0
        %2641 = vmatpush1.bf16.msra.mxu0 %v2622
        %2642 = vmatprep.subr.bf16.mxu0 0
        %2643 = vmatpush1.bf16.msra.mxu0 %v2623
        %2644 = vmatprep.subr.bf16.mxu0 0
        %2645 = vmatpush1.bf16.msra.mxu0 %v2624
        %2646 = vmatprep.subr.bf16.mxu0 0
        %2647 = vmatpush1.bf16.msra.mxu0 %v2625
        %2648 = vmatprep.subr.bf16.mxu0 0
        %2649 = vmatpush1.bf16.msra.mxu0 %v2626
        %2650 = vmatprep.subr.bf16.mxu0 0
        %2651 = vmatpush1.bf16.msra.mxu0 %v2627
        %2652 = vmatprep.subr.bf16.mxu0 0
        %2653 = vmatpush1.bf16.msra.mxu0 0
        %2654 = vmatprep.subr.bf16.mxu0 0
        %2655 = vmatpush1.bf16.msra.mxu0 0
        %2656 = vmatprep.subr.bf16.mxu0 0
        %2657 = vmatpush1.bf16.msra.mxu0 0
        %2658 = vmatprep.subr.bf16.mxu0 0
        %2659 = vmatpush1.bf16.msra.mxu0 0
        %2660 = vmatprep.subr.bf16.mxu0 0
        %2661 = vmatpush1.bf16.msra.mxu0 0
        %2662 = vmatprep.subr.bf16.mxu0 0
        %2663 = vmatpush1.bf16.msra.mxu0 0
        %2664 = vmatprep.subr.bf16.mxu0 0
        %2665 = vmatpush1.bf16.msra.mxu0 0
        %2666 = vmatprep.subr.bf16.mxu0 0
        %2667 = vmatpush1.bf16.msra.mxu0 0
        %2668 = vmatprep.mubr.bf16.mxu0 0
        %2669 = vmatmul.mubr.bf16.gmra.mrb[0].mxu0 %v2581
        %v2670 = vpop.f32.mrb[0].mxu0
        %v2671 = vadd.f32 %v2586, %v2670
        %v2672 = vpop.f32.mrb[0].mxu0
        %v2673 = vpop.f32.mrb[0].mxu0
        %v2674 = vpop.f32.mrb[0].mxu0
        %2675 = vdwg.mxu0
        %v2676 = vmax.f32 %v2671, 0.0
        %v2677 = vpack.c.bf16 %v2676, %v2676
        %v2679 = vlaneseq
        %v2680 = vshrl.u32 %v2679, 7
        %v2681 = vsub.s32 0, %v2680
        %v2682 = vrot.slane %v441, %v2681
        %v2700 = vunpack.c.l.b16 %v490
        %v2701 = vunpack.c.l.b16 %v491
        %v2702 = vunpack.c.l.b16 %v492
        %v2703 = vunpack.c.l.b16 %v493
        %v2704 = vunpack.c.l.b16 %v494
        %v2705 = vunpack.c.l.b16 %v495
        %v2706 = vunpack.c.l.b16 %v496
        %v2707 = vunpack.c.l.b16 %v497
        %v2708 = vunpack.c.l.b16 %v498
        %v2709 = vunpack.c.l.b16 %v499
        %v2710 = vunpack.c.l.b16 %v500
        %v2711 = vunpack.c.l.b16 %v501
        %v2712 = vunpack.c.l.b16 %v502
        %v2713 = vunpack.c.l.b16 %v503
        %v2714 = vunpack.c.l.b16 %v504
        %v2715 = vunpack.c.l.b16 %v505
        %v2716 = vpack.c.b16 %v2701, %v2700
        %v2717 = vpack.c.b16 %v2703, %v2702
        %v2718 = vpack.c.b16 %v2705, %v2704
        %v2719 = vpack.c.b16 %v2707, %v2706
        %v2720 = vpack.c.b16 %v2709, %v2708
        %v2721 = vpack.c.b16 %v2711, %v2710
        %v2722 = vpack.c.b16 %v2713, %v2712
        %v2723 = vpack.c.b16 %v2715, %v2714
        %2732 = vmatprep.subr.bf16.mxu0 0
        %2733 = vmatpush1.bf16.msra.mxu0 %v2716
        %2734 = vmatprep.subr.bf16.mxu0 0
        %2735 = vmatpush1.bf16.msra.mxu0 %v2717
        %2736 = vmatprep.subr.bf16.mxu0 0
        %2737 = vmatpush1.bf16.msra.mxu0 %v2718
        %2738 = vmatprep.subr.bf16.mxu0 0
        %2739 = vmatpush1.bf16.msra.mxu0 %v2719
        %2740 = vmatprep.subr.bf16.mxu0 0
        %2741 = vmatpush1.bf16.msra.mxu0 %v2720
        %2742 = vmatprep.subr.bf16.mxu0 0
        %2743 = vmatpush1.bf16.msra.mxu0 %v2721
        %2744 = vmatprep.subr.bf16.mxu0 0
        %2745 = vmatpush1.bf16.msra.mxu0 %v2722
        %2746 = vmatprep.subr.bf16.mxu0 0
        %2747 = vmatpush1.bf16.msra.mxu0 %v2723
        %2748 = vmatprep.subr.bf16.mxu0 0
        %2749 = vmatpush1.bf16.msra.mxu0 0
        %2750 = vmatprep.subr.bf16.mxu0 0
        %2751 = vmatpush1.bf16.msra.mxu0 0
        %2752 = vmatprep.subr.bf16.mxu0 0
        %2753 = vmatpush1.bf16.msra.mxu0 0
        %2754 = vmatprep.subr.bf16.mxu0 0
        %2755 = vmatpush1.bf16.msra.mxu0 0
        %2756 = vmatprep.subr.bf16.mxu0 0
        %2757 = vmatpush1.bf16.msra.mxu0 0
        %2758 = vmatprep.subr.bf16.mxu0 0
        %2759 = vmatpush1.bf16.msra.mxu0 0
        %2760 = vmatprep.subr.bf16.mxu0 0
        %2761 = vmatpush1.bf16.msra.mxu0 0
        %2762 = vmatprep.subr.bf16.mxu0 0
        %2763 = vmatpush1.bf16.msra.mxu0 0
        %2764 = vmatprep.mubr.bf16.mxu0 0
        %2765 = vmatmul.mubr.bf16.gmra.mrb[0].mxu0 %v2677
        %v2766 = vpop.f32.mrb[0].mxu0
        %v2767 = vadd.f32 %v2682, %v2766
        %v2768 = vpop.f32.mrb[0].mxu0
        %v2769 = vpop.f32.mrb[0].mxu0
        %v2770 = vpop.f32.mrb[0].mxu0
        %2771 = vdwg.mxu0
        %v2772 = vmax.f32 %v2767, 0.0
        %v2773 = vlaneseq
        %v2774 = vand.u32 %v2773, 127
        %vm2775 = vcmp.lt.s32.totalorder %v2774, 8
        %v2776 = vsel %vm2775, %v2772, -1e+30
        %2777 = vmax.xlane.f32.xlu0 %v2776
        %v2778 = vpop.xlane.xlu0 %2777
        %v2779 = vsub.f32 %v2776, %v2778
        %v2780 = vmul.f32 %v2779, 1.442695
        %v2781 = vpow.pop %v2780
        %2782 = vadd.xlane.f32.xlu0 %v2781
        %v2783 = vpop.xlane.xlu0 %2782
        %v2784 = vrcp.pop %v2783
        %v2785 = vmul.f32 %v2781, %v2784
        %2786 = vst [vmem:[%s264] sm:$0xff] %v2785
        %p2787 = scmp.lt.s32.totalorder %s18, 1
        %s2788 = scalar_select %p2787, %s18, 1
        %s2789 = smul.addr %s2788, 8
        %s2790 = scalar_lea.vmem %s6, %s2789
        // Predicated region
        $region49: #{actor_forward.1} parent=43 // pred_check
          %p2791 = pneg %p167
        $region50: #{actor_forward.1} parent=43 // pred_check_branch
          %2793 = sbr.rel (%p2791) target = $region52
        $region51: #{actor_forward.1} parent=43 // pred_region
          _
        $region52: #{actor_forward.1} parent=43 // pred_fallthru
          _
      $region44: #{actor_forward.1} parent=5 // pred_fallthru
        _
      %p2794 = scmp.le.s32.totalorder 2, %s13
      // Predicated region
      $region53: #{actor_forward.1} parent=5 // pred_check
        %p2795 = pneg %p2794
      $region54: #{actor_forward.1} parent=5 // pred_check_branch
        %2797 = sbr.rel (%p2795) target = $region56
      $region55: #{actor_forward.1} parent=5 // pred_region
        %s2798 = ssub.s32 %s13, 2
        // Predicated region
        $region57: #{actor_forward.1} parent=55 // pred_check
          %p2799 = pneg %p173
        $region58: #{actor_forward.1} parent=55 // pred_check_branch
          %2801 = sbr.rel (%p2799) target = $region60
        $region59: #{actor_forward.1} parent=55 // pred_region
          %p2802 = scmp.lt.s32.totalorder %s19, 1
          %s2803 = scalar_select %p2802, %s19, 1
          %s2804 = smul.addr %s2803, 8
          %s2805 = scalar_lea.vmem %s6, %s2804
        $region60: #{actor_forward.1} parent=55 // pred_fallthru
          _
      $region56: #{actor_forward.1} parent=5 // pred_fallthru
        _
    $region6: #{actor_forward.1} parent=1 // loop_footer
      %s17 = sadd.s32 1, %s13
    $region7: #{actor_forward.1} parent=1 // loop_footer_branch
      %12 = sbr.rel target = $region3
    $region8: #{actor_forward.1} parent=1 // loop_exit
      _
    %2806 = vsyncpa [#allocation4], 1
    %s2807 = scalar_lea.sflag [#allocation4], 1
    %2808 = vsyncpa %s2807, 1

</llo_original>
